<compile_context>
chip_gen: v7x
topology: tpu7x:2x2x1
jax: 0.10.0
libtpu: 0.0.40
codegen_flags: <defaults>
</compile_context>

<pallas_src>
import functools

import jax
import jax.numpy as jnp
from jax import lax
from jax.experimental import pallas as pl
from jax.experimental.pallas import tpu as pltpu


# ------------------------------ helpers ----------------------------------- #

def _tile_and_pad(dim, candidates, full_cap):
    """Pick a tile for `dim`.

    Returns (tile, padded_dim). Prefers the largest candidate that divides the
    dim; small non-divisible dims become a single full block (always legal);
    large non-divisible dims fall back to padding up to a tile multiple
    (safety net — never triggered at the shapes used here)."""
    for t in candidates:
        if t <= dim and dim % t == 0:
            return t, dim
    if dim <= full_cap:
        return dim, dim
    t = max(c for c in candidates if c <= dim)
    return t, ((dim + t - 1) // t) * t


def _heads_per_block(n_heads, head_dim):
    """Smallest head group whose lane width is a multiple of 128 (else all)."""
    for hpb in range(1, n_heads):
        if n_heads % hpb == 0 and (hpb * head_dim) % 128 == 0:
            return hpb
    return n_heads


# -------------------------- fused dense kernel ----------------------------- #

def _dense_kernel(x_ref, w_ref, b_ref, o_ref, acc_ref, *, activation,
                  transpose_rhs):
    # K-accumulation in an f32 VMEM scratch; bias + activation on last K step.
    @pl.when(pl.program_id(2) == 0)
    def _():
        acc_ref[...] = jnp.zeros_like(acc_ref)

    if transpose_rhs:
        # x:(tm,tk) @ w:(tn,tk)^T — contract last dims, no transpose in HBM.
        acc_ref[...] += lax.dot_general(
            x_ref[...], w_ref[...], (((1,), (1,)), ((), ())),
            preferred_element_type=jnp.float32)
    else:
        acc_ref[...] += jnp.dot(x_ref[...], w_ref[...],
                                preferred_element_type=jnp.float32)

    @pl.when(pl.program_id(2) == pl.num_programs(2) - 1)
    def _():
        y = acc_ref[...] + b_ref[...]                     # f32 epilogue
        if activation == "gelu":
            # tanh-approx GELU (original BERT). TODO(synk): PyTorch nn.GELU
            # default is the erf form; tiny numeric drift.
            c = 0.7978845608028654  # sqrt(2/pi)
            y = 0.5 * y * (1.0 + jnp.tanh(c * (y + 0.044715 * y * y * y)))
        o_ref[...] = y.astype(o_ref.dtype)


def dense(x, w, b=None, *, activation="none", transpose_rhs=False,
          out_dtype=jnp.bfloat16, tm_candidates=(256, 128, 64, 32, 16, 8)):
    """x:[M,K] (bf16) @ w (bf16) + b -> [M,N] in `out_dtype`.

    w is [K,N], or [N,K] when transpose_rhs=True (tied-embedding LM head)."""
    M, K = x.shape
    N = w.shape[0] if transpose_rhs else w.shape[1]
    if b is None:
        b = jnp.zeros((N,), jnp.float32)
    b2 = b.reshape(1, N).astype(jnp.float32)

    tm, Mp = _tile_and_pad(M, tm_candidates, full_cap=512)
    tn, Np = _tile_and_pad(N, (512, 256, 128), full_cap=1024)
    tk, Kp = _tile_and_pad(K, (512, 256, 128), full_cap=1024)

    # Safety-net zero padding (no-op at the shapes used here: vocab is padded
    # to a multiple of 128 once at init; H / 3H / FF dims divide the tiles).
    if (Mp, Kp) != (M, K):
        x = jnp.pad(x, ((0, Mp - M), (0, Kp - K)))
    if transpose_rhs:
        if w.shape != (Np, Kp):
            w = jnp.pad(w, ((0, Np - N), (0, Kp - K)))
        w_spec = pl.BlockSpec((tn, tk), lambda i, j, k: (j, k))
    else:
        if w.shape != (Kp, Np):
            w = jnp.pad(w, ((0, Kp - K), (0, Np - N)))
        w_spec = pl.BlockSpec((tk, tn), lambda i, j, k: (k, j))
    if Np != N:
        b2 = jnp.pad(b2, ((0, 0), (0, Np - N)))

    kernel = functools.partial(_dense_kernel, activation=activation,
                               transpose_rhs=transpose_rhs)
    out = pl.pallas_call(
        kernel,
        out_shape=jax.ShapeDtypeStruct((Mp, Np), out_dtype),
        grid=(Mp // tm, Np // tn, Kp // tk),
        in_specs=[pl.BlockSpec((tm, tk), lambda i, j, k: (i, k)),
                  w_spec,
                  pl.BlockSpec((1, tn), lambda i, j, k: (0, j))],
        out_specs=pl.BlockSpec((tm, tn), lambda i, j, k: (i, j)),
        scratch_shapes=[pltpu.VMEM((tm, tn), jnp.float32)],
        compiler_params=pltpu.CompilerParams(
            dimension_semantics=("parallel", "parallel", "arbitrary")),
    )(x, w, b2)
    if (Mp, Np) != (M, N):
        out = out[:M, :N]
    return out


# ----------------------- residual + LayerNorm kernel ----------------------- #

def _res_ln_kernel(x_ref, r_ref, g_ref, b_ref, o_ref, *, eps):
    x = x_ref[...].astype(jnp.float32) + r_ref[...].astype(jnp.float32)
    mu = jnp.mean(x, axis=-1, keepdims=True)
    var = jnp.mean(jnp.square(x - mu), axis=-1, keepdims=True)
    y = (x - mu) * lax.rsqrt(var + eps)
    o_ref[...] = (y * g_ref[...] + b_ref[...]).astype(o_ref.dtype)


def residual_layer_norm(x, res, gamma, beta, eps=1e-12):
    """LayerNorm(x + res): residual add fused, f32 math, bf16 in/out."""
    M, H = x.shape
    gamma = gamma.reshape(1, H).astype(jnp.float32)
    beta = beta.reshape(1, H).astype(jnp.float32)
    tm, _ = _tile_and_pad(M, (512, 256, 128, 64, 32, 16, 8), full_cap=1 << 30)
    kernel = functools.partial(_res_ln_kernel, eps=eps)
    return pl.pallas_call(
        kernel,
        out_shape=jax.ShapeDtypeStruct((M, H), jnp.bfloat16),
        grid=(M // tm,),
        in_specs=[pl.BlockSpec((tm, H), lambda i: (i, 0)),
                  pl.BlockSpec((tm, H), lambda i: (i, 0)),
                  pl.BlockSpec((1, H), lambda i: (0, 0)),
                  pl.BlockSpec((1, H), lambda i: (0, 0))],
        out_specs=pl.BlockSpec((tm, H), lambda i: (i, 0)),
        compiler_params=pltpu.CompilerParams(dimension_semantics=("parallel",)),
    )(x, res, gamma, beta)


# --------------------------- attention kernel ------------------------------ #

def _attn_kernel(qkv_ref, mask_ref, ctx_ref, p_ref, *, heads_per_block,
                 head_dim):
    """One grid step = one (batch, head-group) pair.

    qkv_ref: (S, hpb*3*dh) bf16, head-interleaved [q_h | k_h | v_h] per head
             (Q columns are pre-scaled by 1/sqrt(dh) at parameter setup).
    mask_ref: (1, 1, S) f32 additive key-pad mask.
    ctx_ref:  (S, hpb*dh) bf16 — merged heads of this group (lane-dense block).
    p_ref:    (1, hpb, S, S) bf16 attention probabilities.
    """
    mask = mask_ref[0]                                     # (1, S) f32
    for i in range(heads_per_block):                       # static, tiny unroll
        base = i * 3 * head_dim
        q = qkv_ref[:, base:base + head_dim]               # (S, dh) bf16
        k = qkv_ref[:, base + head_dim:base + 2 * head_dim]
        v = qkv_ref[:, base + 2 * head_dim:base + 3 * head_dim]

        # q @ k^T without an explicit transpose (contract last dims on MXU).
        s = lax.dot_general(q, k, (((1,), (1,)), ((), ())),
                            preferred_element_type=jnp.float32) + mask
        s = s - jnp.max(s, axis=-1, keepdims=True)
        e = jnp.exp(s)
        inv = 1.0 / jnp.sum(e, axis=-1, keepdims=True)     # exact: probs sum to 1
        p = e * inv

        p_ref[0, i] = p.astype(p_ref.dtype)
        ctx_ref[:, i * head_dim:(i + 1) * head_dim] = jnp.dot(
            p.astype(v.dtype), v,
            preferred_element_type=jnp.float32).astype(ctx_ref.dtype)


def attention(qkv2d, key_mask, *, batch, seq, n_heads, head_dim):
    """qkv2d: [B*S, 3H] fused head-interleaved projections (bf16);
    key_mask: [B, 1, S] additive f32.

    Returns (context [B*S, H] bf16, probs [B, nH, S, S] bf16)."""
    H = n_heads * head_dim
    hpb = _heads_per_block(n_heads, head_dim)
    n_groups = n_heads // hpb
    kernel = functools.partial(_attn_kernel, heads_per_block=hpb,
                               head_dim=head_dim)
    ctx, probs = pl.pallas_call(
        kernel,
        out_shape=(jax.ShapeDtypeStruct((batch * seq, H), jnp.bfloat16),
                   jax.ShapeDtypeStruct((batch, n_heads, seq, seq),
                                        jnp.bfloat16)),
        grid=(batch, n_groups),
        in_specs=[pl.BlockSpec((seq, hpb * 3 * head_dim), lambda b, g: (b, g)),
                  pl.BlockSpec((1, 1, seq), lambda b, g: (b, 0, 0))],
        out_specs=(pl.BlockSpec((seq, hpb * head_dim), lambda b, g: (b, g)),
                   pl.BlockSpec((1, hpb, seq, seq),
                                lambda b, g: (b, g, 0, 0))),
        compiler_params=pltpu.CompilerParams(
            dimension_semantics=("parallel", "parallel")),
    )(qkv2d, key_mask)
    return ctx, probs


# ------------------------------ Parameters -------------------------------- #

def init_params(key, cfg):
    H, F, L = cfg["hidden_dim"], cfg["ff_dim"], cfg["n_layers"]
    V, nH = cfg["vocab_size"], cfg["n_heads"]
    dh = H // nH
    Vp = ((V + 127) // 128) * 128          # pad vocab to a lane multiple ONCE
    keys = iter(jax.random.split(key, 8 + 8 * L))

    def nrm(shape, s=0.02):
        return (s * jax.random.normal(next(keys), shape)).astype(jnp.float32)

    def bf(x):
        return x.astype(jnp.bfloat16)       # weights live in bf16 (no per-call cast)

    tok = nrm((Vp, H))
    if Vp != V:
        tok = tok.at[V:, :].set(0.0)

    scale = 1.0 / (dh ** 0.5)

    params = {
        "tok_emb": bf(tok),                       # [Vp, H]; tied to the LM head
        "pos_emb": bf(nrm((cfg["max_seq"], H))),
        "seg_emb": bf(nrm((cfg["n_segments"], H))),
        "pooler_w": bf(nrm((H, H))),              # BERT.linear
        "pooler_b": jnp.zeros((H,), jnp.float32),
        "cls_w": bf(nrm((H, 2))),                 # projection_cls (bias=False)
        "lm_b": jnp.zeros((Vp,), jnp.float32),    # projection_lm.bias (padded)
        "layers": [],
    }
    for _ in range(L):
        # Fused QKV weight with head-interleaved columns
        #   [q_h0 | k_h0 | v_h0 | q_h1 | k_h1 | v_h1 | ...]
        # and 1/sqrt(dh) folded into the Q columns (setup-time transform;
        # a real checkpoint would be permuted+scaled once at load time).
        wqkv = nrm((H, 3 * H)).reshape(H, nH, 3, dh)
        wqkv = wqkv.at[:, :, 0, :].multiply(scale).reshape(H, 3 * H)
        bqkv = jnp.zeros((3 * H,), jnp.float32)   # zero bias -> scale fold is a no-op
        params["layers"].append({
            "wqkv": bf(wqkv), "bqkv": bqkv,
            "wo": bf(nrm((H, H))), "bo": jnp.zeros((H,), jnp.float32),
            "ln1_g": jnp.ones((H,), jnp.float32),
            "ln1_b": jnp.zeros((H,), jnp.float32),
            "w1": bf(nrm((H, F))), "b1": jnp.zeros((F,), jnp.float32),
            "w2": bf(nrm((F, H))), "b2": jnp.zeros((H,), jnp.float32),
            "ln2_g": jnp.ones((H,), jnp.float32),
            "ln2_b": jnp.zeros((H,), jnp.float32),
        })
    return params


# ------------------------------- Forward ----------------------------------- #

def bert_pretrain_forward(params, inputs, segments, cfg):
    B, S = inputs.shape
    H, nH, V = cfg["hidden_dim"], cfg["n_heads"], cfg["vocab_size"]
    dh = H // nH

    # Embeddings (gathers stay in plain JAX — glue). All bf16, no extra casts.
    pos = jnp.arange(S)
    x = (params["tok_emb"][inputs]
         + params["pos_emb"][pos][None, :, :]
         + params["seg_emb"][segments])
    x2d = x.reshape(B * S, H)                                  # bf16

    # Additive key-pad mask: [B, 1, S]; broadcast over query rows in-kernel.
    pad = (inputs == cfg["pad_id"])                            # [B, S]
    key_mask = jnp.where(pad, -1e9, 0.0).astype(jnp.float32).reshape(B, 1, S)

    all_probs = []
    for lp in params["layers"]:
        # Fused QKV projection (one matmul), bf16 out, heads split in-kernel.
        qkv2d = dense(x2d, lp["wqkv"], lp["bqkv"])             # [B*S, 3H] bf16
        ctx2d, probs = attention(qkv2d, key_mask, batch=B, seq=S,
                                 n_heads=nH, head_dim=dh)
        all_probs.append(probs)
        attn_out = dense(ctx2d, lp["wo"], lp["bo"])            # bf16
        x2d = residual_layer_norm(x2d, attn_out, lp["ln1_g"], lp["ln1_b"])
        ff = dense(x2d, lp["w1"], lp["b1"], activation="gelu") # bf16
        ff = dense(ff, lp["w2"], lp["b2"])                     # bf16
        x2d = residual_layer_norm(x2d, ff, lp["ln2_g"], lp["ln2_b"])
    # TODO(synk): dropout omitted (inference semantics, p effectively 0).

    attention_probs = jnp.stack(all_probs, axis=0)   # [n_layers, B, nH, S, S] bf16

    # BERT pooler + CLS head: tiny M — plain jnp (MXU would be ~1% utilized).
    outputs = x2d.reshape(B, S, H)
    cls = outputs[:, 0, :]                                      # [B, H] bf16
    outputs_cls = jnp.tanh(
        jnp.dot(cls, params["pooler_w"], preferred_element_type=jnp.float32)
        + params["pooler_b"])
    logits_cls = jnp.dot(outputs_cls.astype(jnp.bfloat16), params["cls_w"],
                         preferred_element_type=jnp.float32)    # Linear(H,2,no bias)

    # Tied-embedding LM head: [B*S,H] x [Vp,H]^T streamed in tiles, f32 out,
    # big row tile to minimize re-streams of the [Vp,H] weight.
    logits_lm = dense(x2d, params["tok_emb"], params["lm_b"],
                      transpose_rhs=True, out_dtype=jnp.float32,
                      tm_candidates=(512, 256, 128, 64, 32, 16, 8))
    logits_lm = logits_lm.reshape(B, S, -1)[:, :, :V]           # drop vocab pad
    return logits_cls, logits_lm, attention_probs


# --------------------------------- Main ------------------------------------ #

if __name__ == "__main__":
    cfg = dict(vocab_size=128, hidden_dim=32, n_heads=4, ff_dim=64, n_layers=2,
               max_seq=16, n_segments=2, pad_id=0)

    key = jax.random.PRNGKey(0)
    pkey, ikey = jax.random.split(key, 2)
    params = init_params(pkey, cfg)

    B, S = 2, 8
    inputs = jax.random.randint(ikey, (B, S), 1, cfg["vocab_size"], dtype=jnp.int32)
    inputs = inputs.at[1, -2:].set(cfg["pad_id"])        # some pad tokens
    segments = jnp.concatenate([jnp.zeros((B, S // 2), jnp.int32),
                                jnp.ones((B, S // 2), jnp.int32)], axis=1)

    fwd = jax.jit(functools.partial(bert_pretrain_forward, cfg=cfg))
    logits_cls, logits_lm, attention_probs = fwd(params, inputs, segments)
    jax.block_until_ready((logits_cls, logits_lm, attention_probs))

    assert logits_cls.shape == (B, 2)
    assert logits_lm.shape == (B, S, cfg["vocab_size"])
    assert attention_probs.shape == (cfg["n_layers"], B, cfg["n_heads"], S, S)
    assert jnp.all(jnp.isfinite(logits_lm))
    assert jnp.all(jnp.isfinite(attention_probs.astype(jnp.float32)))
    # softmax rows should sum to ~1 (exact reciprocal in the kernel)
    row_sums = attention_probs.astype(jnp.float32).sum(-1)
    assert jnp.allclose(row_sums, 1.0, atol=2e-2)
    print("KERNEL_OK")
</pallas_src>

<mosaic_0001>
module attributes {stable_mosaic.version = 11 : i64} {
  func.func @_dense_kernel(%arg0: i32, %arg1: i32, %arg2: i32, %arg3: memref<16x32xbf16, #tpu.memory_space<vmem>>, %arg4: memref<32x96xbf16, #tpu.memory_space<vmem>>, %arg5: memref<1x96xf32, #tpu.memory_space<vmem>>, %arg6: memref<16x96xbf16, #tpu.memory_space<vmem>>, %arg7: memref<16x96xf32, #tpu.memory_space<vmem>>) attributes {dimension_semantics = [#tpu.dimension_semantics<parallel>, #tpu.dimension_semantics<parallel>, #tpu.dimension_semantics<arbitrary>], iteration_bounds = array<i64: 1, 1, 1>, scalar_prefetch = 0 : i64, scratch_operands = 1 : i64, tpu.core_type = #tpu.core_type<tc>, window_params = [{transform_indices = @transform_0, window_bounds = array<i64: 16, 32>}, {transform_indices = @transform_1, window_bounds = array<i64: 32, 96>}, {transform_indices = @transform_2, window_bounds = array<i64: 1, 96>}, {transform_indices = @transform_3, window_bounds = array<i64: 16, 96>}]} {
    %c0_i32 = arith.constant 0 : i32
    %0 = arith.cmpi eq, %arg2, %c0_i32 : i32
    %1 = arith.extui %0 : i1 to i32
    %c0_i32_0 = arith.constant 0 : i32
    %2 = arith.cmpi ne, %1, %c0_i32_0 : i32
    scf.if %2 {
      %cst_10 = arith.constant 0.000000e+00 : f32
      %12 = vector.broadcast %cst_10 : f32 to vector<16x96xf32>
      %c0_11 = arith.constant 0 : index
      %c0_12 = arith.constant 0 : index
      %13 = vector.load %arg7[%c0_11, %c0_12] : memref<16x96xf32, #tpu.memory_space<vmem>>, vector<16x96xf32>
      tpu.vector_store %arg7[%c0_11, %c0_12], %12 {strides = array<i32>} : memref<16x96xf32, #tpu.memory_space<vmem>>, vector<16x96xf32>,
    } else {
    }
    %c0 = arith.constant 0 : index
    %c0_1 = arith.constant 0 : index
    %3 = vector.load %arg7[%c0, %c0_1] : memref<16x96xf32, #tpu.memory_space<vmem>>, vector<16x96xf32>
    %c0_2 = arith.constant 0 : index
    %c0_3 = arith.constant 0 : index
    %4 = vector.load %arg3[%c0_2, %c0_3] : memref<16x32xbf16, #tpu.memory_space<vmem>>, vector<16x32xbf16>
    %c0_4 = arith.constant 0 : index
    %c0_5 = arith.constant 0 : index
    %5 = vector.load %arg4[%c0_4, %c0_5] : memref<32x96xbf16, #tpu.memory_space<vmem>>, vector<32x96xbf16>
    %cst = arith.constant dense<0.000000e+00> : vector<16x96xf32>
    %6 = tpu.matmul %4, %5, %cst {dimension_numbers = #tpu.dot_dimension_numbers<[1], [0], [0], [1], [0, 0, 1, 1], [], []>} : vector<16x32xbf16>, vector<32x96xbf16>, vector<16x96xf32> -> vector<16x96xf32>
    %7 = arith.addf %3, %6 : vector<16x96xf32>
    %c0_6 = arith.constant 0 : index
    %c0_7 = arith.constant 0 : index
    %8 = vector.load %arg7[%c0_6, %c0_7] : memref<16x96xf32, #tpu.memory_space<vmem>>, vector<16x96xf32>
    tpu.vector_store %arg7[%c0_6, %c0_7], %7 {strides = array<i32>} : memref<16x96xf32, #tpu.memory_space<vmem>>, vector<16x96xf32>,
    %c0_i32_8 = arith.constant 0 : i32
    %9 = arith.cmpi eq, %arg2, %c0_i32_8 : i32
    %10 = arith.extui %9 : i1 to i32
    %c0_i32_9 = arith.constant 0 : i32
    %11 = arith.cmpi ne, %10, %c0_i32_9 : i32
    scf.if %11 {
      %c0_10 = arith.constant 0 : index
      %c0_11 = arith.constant 0 : index
      %12 = vector.load %arg7[%c0_10, %c0_11] : memref<16x96xf32, #tpu.memory_space<vmem>>, vector<16x96xf32>
      %c0_12 = arith.constant 0 : index
      %c0_13 = arith.constant 0 : index
      %13 = vector.load %arg5[%c0_12, %c0_13] : memref<1x96xf32, #tpu.memory_space<vmem>>, vector<1x96xf32>
      %14 = vector.broadcast %13 : vector<1x96xf32> to vector<16x96xf32>
      %15 = arith.addf %12, %14 : vector<16x96xf32>
      %16 = arith.truncf %15 : vector<16x96xf32> to vector<16x96xbf16>
      %c0_14 = arith.constant 0 : index
      %c0_15 = arith.constant 0 : index
      %17 = vector.load %arg6[%c0_14, %c0_15] : memref<16x96xbf16, #tpu.memory_space<vmem>>, vector<16x96xbf16>
      tpu.vector_store %arg6[%c0_14, %c0_15], %16 {strides = array<i32>} : memref<16x96xbf16, #tpu.memory_space<vmem>>, vector<16x96xbf16>,
    } else {
    }
    return
  }
  func.func @transform_0(%arg0: i32, %arg1: i32, %arg2: i32) -> (i32, i32) {
    %c0_i32 = arith.constant 0 : i32
    return %arg0, %arg2 : i32, i32
  }
  func.func @transform_1(%arg0: i32, %arg1: i32, %arg2: i32) -> (i32, i32) {
    %c0_i32 = arith.constant 0 : i32
    return %arg2, %arg1 : i32, i32
  }
  func.func @transform_2(%arg0: i32, %arg1: i32, %arg2: i32) -> (i32, i32) {
    %c0_i32 = arith.constant 0 : i32
    %c0_i32_0 = arith.constant 0 : i32
    return %c0_i32, %arg1 : i32, i32
  }
  func.func @transform_3(%arg0: i32, %arg1: i32, %arg2: i32) -> (i32, i32) {
    %c0_i32 = arith.constant 0 : i32
    return %arg0, %arg1 : i32, i32
  }
}

module attributes {stable_mosaic.version = 11 : i64} {
  func.func @_attn_kernel(%arg0: i32, %arg1: i32, %arg2: memref<8x96xbf16, #tpu.memory_space<vmem>>, %arg3: memref<1x1x8xf32, #tpu.memory_space<vmem>>, %arg4: memref<8x32xbf16, #tpu.memory_space<vmem>>, %arg5: memref<1x4x8x8xbf16, #tpu.memory_space<vmem>>) attributes {dimension_semantics = [#tpu.dimension_semantics<parallel>, #tpu.dimension_semantics<parallel>], iteration_bounds = array<i64: 2, 1>, scalar_prefetch = 0 : i64, scratch_operands = 0 : i64, tpu.core_type = #tpu.core_type<tc>, window_params = [{transform_indices = @transform_0, window_bounds = array<i64: 8, 96>}, {transform_indices = @transform_1, window_bounds = array<i64: 1, 1, 8>}, {transform_indices = @transform_2, window_bounds = array<i64: 8, 32>}, {transform_indices = @transform_3, window_bounds = array<i64: 1, 4, 8, 8>}]} {
    %c0 = arith.constant 0 : index
    %c0_0 = arith.constant 0 : index
    %c0_1 = arith.constant 0 : index
    %0 = vector.load %arg3[%c0, %c0_0, %c0_1] : memref<1x1x8xf32, #tpu.memory_space<vmem>>, vector<1x1x8xf32>
    %1 = vector.shape_cast %0 : vector<1x1x8xf32> to vector<1x8xf32>
    %c0_2 = arith.constant 0 : index
    %c0_3 = arith.constant 0 : index
    %2 = vector.load %arg2[%c0_2, %c0_3] : memref<8x96xbf16, #tpu.memory_space<vmem>>, vector<8x8xbf16>
    %c0_4 = arith.constant 0 : index
    %c8 = arith.constant 8 : index
    %3 = vector.load %arg2[%c0_4, %c8] : memref<8x96xbf16, #tpu.memory_space<vmem>>, vector<8x8xbf16>
    %c0_5 = arith.constant 0 : index
    %c16 = arith.constant 16 : index
    %4 = vector.load %arg2[%c0_5, %c16] : memref<8x96xbf16, #tpu.memory_space<vmem>>, vector<8x8xbf16>
    %cst = arith.constant dense<0.000000e+00> : vector<8x8xf32>
    %5 = tpu.matmul %2, %3, %cst {dimension_numbers = #tpu.dot_dimension_numbers<[1], [1], [0], [0], [0, 0, 1, 0], [], []>} : vector<8x8xbf16>, vector<8x8xbf16>, vector<8x8xf32> -> vector<8x8xf32>
    %6 = vector.broadcast %1 : vector<1x8xf32> to vector<8x8xf32>
    %7 = arith.addf %5, %6 : vector<8x8xf32>
    %cst_6 = arith.constant dense<0xFF800000> : vector<8xf32>
    %8 = vector.multi_reduction <maximumf>, %7, %cst_6 [1] : vector<8x8xf32> to vector<8xf32>
    %9 = vector.shape_cast %8 : vector<8xf32> to vector<8x1xf32>
    %10 = vector.broadcast %9 : vector<8x1xf32> to vector<8x8xf32>
    %11 = arith.subf %7, %10 : vector<8x8xf32>
    %12 = math.exp %11 : vector<8x8xf32>
    %cst_7 = arith.constant dense<0.000000e+00> : vector<8xf32>
    %13 = vector.multi_reduction <add>, %12, %cst_7 [1] : vector<8x8xf32> to vector<8xf32>
    %14 = vector.shape_cast %13 : vector<8xf32> to vector<8x1xf32>
    %cst_8 = arith.constant 1.000000e+00 : f32
    %15 = vector.broadcast %cst_8 : f32 to vector<8x1xf32>
    %16 = arith.divf %15, %14 : vector<8x1xf32>
    %17 = vector.broadcast %16 : vector<8x1xf32> to vector<8x8xf32>
    %18 = arith.mulf %12, %17 : vector<8x8xf32>
    %19 = arith.truncf %18 : vector<8x8xf32> to vector<8x8xbf16>
    %c0_9 = arith.constant 0 : index
    %c0_10 = arith.constant 0 : index
    %c0_11 = arith.constant 0 : index
    %c0_12 = arith.constant 0 : index
    %20 = vector.load %arg5[%c0_9, %c0_10, %c0_11, %c0_12] : memref<1x4x8x8xbf16, #tpu.memory_space<vmem>>, vector<1x1x8x8xbf16>
    %21 = vector.shape_cast %20 : vector<1x1x8x8xbf16> to vector<8x8xbf16>
    %22 = vector.shape_cast %19 : vector<8x8xbf16> to vector<1x1x8x8xbf16>
    tpu.vector_store %arg5[%c0_9, %c0_10, %c0_11, %c0_12], %22 {strides = array<i32>} : memref<1x4x8x8xbf16, #tpu.memory_space<vmem>>, vector<1x1x8x8xbf16>,
    %23 = arith.truncf %18 : vector<8x8xf32> to vector<8x8xbf16>
    %cst_13 = arith.constant dense<0.000000e+00> : vector<8x8xf32>
    %24 = tpu.matmul %23, %4, %cst_13 {dimension_numbers = #tpu.dot_dimension_numbers<[1], [0], [0], [1], [0, 0, 1, 1], [], []>} : vector<8x8xbf16>, vector<8x8xbf16>, vector<8x8xf32> -> vector<8x8xf32>
    %25 = arith.truncf %24 : vector<8x8xf32> to vector<8x8xbf16>
    %c0_14 = arith.constant 0 : index
    %c0_15 = arith.constant 0 : index
    %26 = vector.load %arg4[%c0_14, %c0_15] : memref<8x32xbf16, #tpu.memory_space<vmem>>, vector<8x8xbf16>
    tpu.vector_store %arg4[%c0_14, %c0_15], %25 {strides = array<i32>} : memref<8x32xbf16, #tpu.memory_space<vmem>>, vector<8x8xbf16>,
    %c0_16 = arith.constant 0 : index
    %c24 = arith.constant 24 : index
    %27 = vector.load %arg2[%c0_16, %c24] : memref<8x96xbf16, #tpu.memory_space<vmem>>, vector<8x8xbf16>
    %c0_17 = arith.constant 0 : index
    %c32 = arith.constant 32 : index
    %28 = vector.load %arg2[%c0_17, %c32] : memref<8x96xbf16, #tpu.memory_space<vmem>>, vector<8x8xbf16>
    %c0_18 = arith.constant 0 : index
    %c40 = arith.constant 40 : index
    %29 = vector.load %arg2[%c0_18, %c40] : memref<8x96xbf16, #tpu.memory_space<vmem>>, vector<8x8xbf16>
    %cst_19 = arith.constant dense<0.000000e+00> : vector<8x8xf32>
    %30 = tpu.matmul %27, %28, %cst_19 {dimension_numbers = #tpu.dot_dimension_numbers<[1], [1], [0], [0], [0, 0, 1, 0], [], []>} : vector<8x8xbf16>, vector<8x8xbf16>, vector<8x8xf32> -> vector<8x8xf32>
    %31 = vector.broadcast %1 : vector<1x8xf32> to vector<8x8xf32>
    %32 = arith.addf %30, %31 : vector<8x8xf32>
    %cst_20 = arith.constant dense<0xFF800000> : vector<8xf32>
    %33 = vector.multi_reduction <maximumf>, %32, %cst_20 [1] : vector<8x8xf32> to vector<8xf32>
    %34 = vector.shape_cast %33 : vector<8xf32> to vector<8x1xf32>
    %35 = vector.broadcast %34 : vector<8x1xf32> to vector<8x8xf32>
    %36 = arith.subf %32, %35 : vector<8x8xf32>
    %37 = math.exp %36 : vector<8x8xf32>
    %cst_21 = arith.constant dense<0.000000e+00> : vector<8xf32>
    %38 = vector.multi_reduction <add>, %37, %cst_21 [1] : vector<8x8xf32> to vector<8xf32>
    %39 = vector.shape_cast %38 : vector<8xf32> to vector<8x1xf32>
    %cst_22 = arith.constant 1.000000e+00 : f32
    %40 = vector.broadcast %cst_22 : f32 to vector<8x1xf32>
    %41 = arith.divf %40, %39 : vector<8x1xf32>
    %42 = vector.broadcast %41 : vector<8x1xf32> to vector<8x8xf32>
    %43 = arith.mulf %37, %42 : vector<8x8xf32>
    %44 = arith.truncf %43 : vector<8x8xf32> to vector<8x8xbf16>
    %c0_23 = arith.constant 0 : index
    %c1 = arith.constant 1 : index
    %c0_24 = arith.constant 0 : index
    %c0_25 = arith.constant 0 : index
    %45 = vector.load %arg5[%c0_23, %c1, %c0_24, %c0_25] : memref<1x4x8x8xbf16, #tpu.memory_space<vmem>>, vector<1x1x8x8xbf16>
    %46 = vector.shape_cast %45 : vector<1x1x8x8xbf16> to vector<8x8xbf16>
    %47 = vector.shape_cast %44 : vector<8x8xbf16> to vector<1x1x8x8xbf16>
    tpu.vector_store %arg5[%c0_23, %c1, %c0_24, %c0_25], %47 {strides = array<i32>} : memref<1x4x8x8xbf16, #tpu.memory_space<vmem>>, vector<1x1x8x8xbf16>,
    %48 = arith.truncf %43 : vector<8x8xf32> to vector<8x8xbf16>
    %cst_26 = arith.constant dense<0.000000e+00> : vector<8x8xf32>
    %49 = tpu.matmul %48, %29, %cst_26 {dimension_numbers = #tpu.dot_dimension_numbers<[1], [0], [0], [1], [0, 0, 1, 1], [], []>} : vector<8x8xbf16>, vector<8x8xbf16>, vector<8x8xf32> -> vector<8x8xf32>
    %50 = arith.truncf %49 : vector<8x8xf32> to vector<8x8xbf16>
    %c0_27 = arith.constant 0 : index
    %c8_28 = arith.constant 8 : index
    %51 = vector.load %arg4[%c0_27, %c8_28] : memref<8x32xbf16, #tpu.memory_space<vmem>>, vector<8x8xbf16>
    tpu.vector_store %arg4[%c0_27, %c8_28], %50 {strides = array<i32>} : memref<8x32xbf16, #tpu.memory_space<vmem>>, vector<8x8xbf16>,
    %c0_29 = arith.constant 0 : index
    %c48 = arith.constant 48 : index
    %52 = vector.load %arg2[%c0_29, %c48] : memref<8x96xbf16, #tpu.memory_space<vmem>>, vector<8x8xbf16>
    %c0_30 = arith.constant 0 : index
    %c56 = arith.constant 56 : index
    %53 = vector.load %arg2[%c0_30, %c56] : memref<8x96xbf16, #tpu.memory_space<vmem>>, vector<8x8xbf16>
    %c0_31 = arith.constant 0 : index
    %c64 = arith.constant 64 : index
    %54 = vector.load %arg2[%c0_31, %c64] : memref<8x96xbf16, #tpu.memory_space<vmem>>, vector<8x8xbf16>
    %cst_32 = arith.constant dense<0.000000e+00> : vector<8x8xf32>
    %55 = tpu.matmul %52, %53, %cst_32 {dimension_numbers = #tpu.dot_dimension_numbers<[1], [1], [0], [0], [0, 0, 1, 0], [], []>} : vector<8x8xbf16>, vector<8x8xbf16>, vector<8x8xf32> -> vector<8x8xf32>
    %56 = vector.broadcast %1 : vector<1x8xf32> to vector<8x8xf32>
    %57 = arith.addf %55, %56 : vector<8x8xf32>
    %cst_33 = arith.constant dense<0xFF800000> : vector<8xf32>
    %58 = vector.multi_reduction <maximumf>, %57, %cst_33 [1] : vector<8x8xf32> to vector<8xf32>
    %59 = vector.shape_cast %58 : vector<8xf32> to vector<8x1xf32>
    %60 = vector.broadcast %59 : vector<8x1xf32> to vector<8x8xf32>
    %61 = arith.subf %57, %60 : vector<8x8xf32>
    %62 = math.exp %61 : vector<8x8xf32>
    %cst_34 = arith.constant dense<0.000000e+00> : vector<8xf32>
    %63 = vector.multi_reduction <add>, %62, %cst_34 [1] : vector<8x8xf32> to vector<8xf32>
    %64 = vector.shape_cast %63 : vector<8xf32> to vector<8x1xf32>
    %cst_35 = arith.constant 1.000000e+00 : f32
    %65 = vector.broadcast %cst_35 : f32 to vector<8x1xf32>
    %66 = arith.divf %65, %64 : vector<8x1xf32>
    %67 = vector.broadcast %66 : vector<8x1xf32> to vector<8x8xf32>
    %68 = arith.mulf %62, %67 : vector<8x8xf32>
    %69 = arith.truncf %68 : vector<8x8xf32> to vector<8x8xbf16>
    %c0_36 = arith.constant 0 : index
    %c2 = arith.constant 2 : index
    %c0_37 = arith.constant 0 : index
    %c0_38 = arith.constant 0 : index
    %70 = vector.load %arg5[%c0_36, %c2, %c0_37, %c0_38] : memref<1x4x8x8xbf16, #tpu.memory_space<vmem>>, vector<1x1x8x8xbf16>
    %71 = vector.shape_cast %70 : vector<1x1x8x8xbf16> to vector<8x8xbf16>
    %72 = vector.shape_cast %69 : vector<8x8xbf16> to vector<1x1x8x8xbf16>
    tpu.vector_store %arg5[%c0_36, %c2, %c0_37, %c0_38], %72 {strides = array<i32>} : memref<1x4x8x8xbf16, #tpu.memory_space<vmem>>, vector<1x1x8x8xbf16>,
    %73 = arith.truncf %68 : vector<8x8xf32> to vector<8x8xbf16>
    %cst_39 = arith.constant dense<0.000000e+00> : vector<8x8xf32>
    %74 = tpu.matmul %73, %54, %cst_39 {dimension_numbers = #tpu.dot_dimension_numbers<[1], [0], [0], [1], [0, 0, 1, 1], [], []>} : vector<8x8xbf16>, vector<8x8xbf16>, vector<8x8xf32> -> vector<8x8xf32>
    %75 = arith.truncf %74 : vector<8x8xf32> to vector<8x8xbf16>
    %c0_40 = arith.constant 0 : index
    %c16_41 = arith.constant 16 : index
    %76 = vector.load %arg4[%c0_40, %c16_41] : memref<8x32xbf16, #tpu.memory_space<vmem>>, vector<8x8xbf16>
    tpu.vector_store %arg4[%c0_40, %c16_41], %75 {strides = array<i32>} : memref<8x32xbf16, #tpu.memory_space<vmem>>, vector<8x8xbf16>,
    %c0_42 = arith.constant 0 : index
    %c72 = arith.constant 72 : index
    %77 = vector.load %arg2[%c0_42, %c72] : memref<8x96xbf16, #tpu.memory_space<vmem>>, vector<8x8xbf16>
    %c0_43 = arith.constant 0 : index
    %c80 = arith.constant 80 : index
    %78 = vector.load %arg2[%c0_43, %c80] : memref<8x96xbf16, #tpu.memory_space<vmem>>, vector<8x8xbf16>
    %c0_44 = arith.constant 0 : index
    %c88 = arith.constant 88 : index
    %79 = vector.load %arg2[%c0_44, %c88] : memref<8x96xbf16, #tpu.memory_space<vmem>>, vector<8x8xbf16>
    %cst_45 = arith.constant dense<0.000000e+00> : vector<8x8xf32>
    %80 = tpu.matmul %77, %78, %cst_45 {dimension_numbers = #tpu.dot_dimension_numbers<[1], [1], [0], [0], [0, 0, 1, 0], [], []>} : vector<8x8xbf16>, vector<8x8xbf16>, vector<8x8xf32> -> vector<8x8xf32>
    %81 = vector.broadcast %1 : vector<1x8xf32> to vector<8x8xf32>
    %82 = arith.addf %80, %81 : vector<8x8xf32>
    %cst_46 = arith.constant dense<0xFF800000> : vector<8xf32>
    %83 = vector.multi_reduction <maximumf>, %82, %cst_46 [1] : vector<8x8xf32> to vector<8xf32>
    %84 = vector.shape_cast %83 : vector<8xf32> to vector<8x1xf32>
    %85 = vector.broadcast %84 : vector<8x1xf32> to vector<8x8xf32>
    %86 = arith.subf %82, %85 : vector<8x8xf32>
    %87 = math.exp %86 : vector<8x8xf32>
    %cst_47 = arith.constant dense<0.000000e+00> : vector<8xf32>
    %88 = vector.multi_reduction <add>, %87, %cst_47 [1] : vector<8x8xf32> to vector<8xf32>
    %89 = vector.shape_cast %88 : vector<8xf32> to vector<8x1xf32>
    %cst_48 = arith.constant 1.000000e+00 : f32
    %90 = vector.broadcast %cst_48 : f32 to vector<8x1xf32>
    %91 = arith.divf %90, %89 : vector<8x1xf32>
    %92 = vector.broadcast %91 : vector<8x1xf32> to vector<8x8xf32>
    %93 = arith.mulf %87, %92 : vector<8x8xf32>
    %94 = arith.truncf %93 : vector<8x8xf32> to vector<8x8xbf16>
    %c0_49 = arith.constant 0 : index
    %c3 = arith.constant 3 : index
    %c0_50 = arith.constant 0 : index
    %c0_51 = arith.constant 0 : index
    %95 = vector.load %arg5[%c0_49, %c3, %c0_50, %c0_51] : memref<1x4x8x8xbf16, #tpu.memory_space<vmem>>, vector<1x1x8x8xbf16>
    %96 = vector.shape_cast %95 : vector<1x1x8x8xbf16> to vector<8x8xbf16>
    %97 = vector.shape_cast %94 : vector<8x8xbf16> to vector<1x1x8x8xbf16>
    tpu.vector_store %arg5[%c0_49, %c3, %c0_50, %c0_51], %97 {strides = array<i32>} : memref<1x4x8x8xbf16, #tpu.memory_space<vmem>>, vector<1x1x8x8xbf16>,
    %98 = arith.truncf %93 : vector<8x8xf32> to vector<8x8xbf16>
    %cst_52 = arith.constant dense<0.000000e+00> : vector<8x8xf32>
    %99 = tpu.matmul %98, %79, %cst_52 {dimension_numbers = #tpu.dot_dimension_numbers<[1], [0], [0], [1], [0, 0, 1, 1], [], []>} : vector<8x8xbf16>, vector<8x8xbf16>, vector<8x8xf32> -> vector<8x8xf32>
    %100 = arith.truncf %99 : vector<8x8xf32> to vector<8x8xbf16>
    %c0_53 = arith.constant 0 : index
    %c24_54 = arith.constant 24 : index
    %101 = vector.load %arg4[%c0_53, %c24_54] : memref<8x32xbf16, #tpu.memory_space<vmem>>, vector<8x8xbf16>
    tpu.vector_store %arg4[%c0_53, %c24_54], %100 {strides = array<i32>} : memref<8x32xbf16, #tpu.memory_space<vmem>>, vector<8x8xbf16>,
    return
  }
  func.func @transform_0(%arg0: i32, %arg1: i32) -> (i32, i32) {
    %c0_i32 = arith.constant 0 : i32
    return %arg0, %arg1 : i32, i32
  }
  func.func @transform_1(%arg0: i32, %arg1: i32) -> (i32, i32, i32) {
    %c0_i32 = arith.constant 0 : i32
    %c0_i32_0 = arith.constant 0 : i32
    %c0_i32_1 = arith.constant 0 : i32
    return %arg0, %c0_i32, %c0_i32_0 : i32, i32, i32
  }
  func.func @transform_2(%arg0: i32, %arg1: i32) -> (i32, i32) {
    %c0_i32 = arith.constant 0 : i32
    return %arg0, %arg1 : i32, i32
  }
  func.func @transform_3(%arg0: i32, %arg1: i32) -> (i32, i32, i32, i32) {
    %c0_i32 = arith.constant 0 : i32
    %c0_i32_0 = arith.constant 0 : i32
    %c0_i32_1 = arith.constant 0 : i32
    return %arg0, %arg1, %c0_i32, %c0_i32_0 : i32, i32, i32, i32
  }
}

module attributes {stable_mosaic.version = 11 : i64} {
  func.func @_dense_kernel(%arg0: i32, %arg1: i32, %arg2: i32, %arg3: memref<16x32xbf16, #tpu.memory_space<vmem>>, %arg4: memref<32x32xbf16, #tpu.memory_space<vmem>>, %arg5: memref<1x32xf32, #tpu.memory_space<vmem>>, %arg6: memref<16x32xbf16, #tpu.memory_space<vmem>>, %arg7: memref<16x32xf32, #tpu.memory_space<vmem>>) attributes {dimension_semantics = [#tpu.dimension_semantics<parallel>, #tpu.dimension_semantics<parallel>, #tpu.dimension_semantics<arbitrary>], iteration_bounds = array<i64: 1, 1, 1>, scalar_prefetch = 0 : i64, scratch_operands = 1 : i64, tpu.core_type = #tpu.core_type<tc>, window_params = [{transform_indices = @transform_0, window_bounds = array<i64: 16, 32>}, {transform_indices = @transform_1, window_bounds = array<i64: 32, 32>}, {transform_indices = @transform_2, window_bounds = array<i64: 1, 32>}, {transform_indices = @transform_3, window_bounds = array<i64: 16, 32>}]} {
    %c0_i32 = arith.constant 0 : i32
    %0 = arith.cmpi eq, %arg2, %c0_i32 : i32
    %1 = arith.extui %0 : i1 to i32
    %c0_i32_0 = arith.constant 0 : i32
    %2 = arith.cmpi ne, %1, %c0_i32_0 : i32
    scf.if %2 {
      %cst_10 = arith.constant 0.000000e+00 : f32
      %12 = vector.broadcast %cst_10 : f32 to vector<16x32xf32>
      %c0_11 = arith.constant 0 : index
      %c0_12 = arith.constant 0 : index
      %13 = vector.load %arg7[%c0_11, %c0_12] : memref<16x32xf32, #tpu.memory_space<vmem>>, vector<16x32xf32>
      tpu.vector_store %arg7[%c0_11, %c0_12], %12 {strides = array<i32>} : memref<16x32xf32, #tpu.memory_space<vmem>>, vector<16x32xf32>,
    } else {
    }
    %c0 = arith.constant 0 : index
    %c0_1 = arith.constant 0 : index
    %3 = vector.load %arg7[%c0, %c0_1] : memref<16x32xf32, #tpu.memory_space<vmem>>, vector<16x32xf32>
    %c0_2 = arith.constant 0 : index
    %c0_3 = arith.constant 0 : index
    %4 = vector.load %arg3[%c0_2, %c0_3] : memref<16x32xbf16, #tpu.memory_space<vmem>>, vector<16x32xbf16>
    %c0_4 = arith.constant 0 : index
    %c0_5 = arith.constant 0 : index
    %5 = vector.load %arg4[%c0_4, %c0_5] : memref<32x32xbf16, #tpu.memory_space<vmem>>, vector<32x32xbf16>
    %cst = arith.constant dense<0.000000e+00> : vector<16x32xf32>
    %6 = tpu.matmul %4, %5, %cst {dimension_numbers = #tpu.dot_dimension_numbers<[1], [0], [0], [1], [0, 0, 1, 1], [], []>} : vector<16x32xbf16>, vector<32x32xbf16>, vector<16x32xf32> -> vector<16x32xf32>
    %7 = arith.addf %3, %6 : vector<16x32xf32>
    %c0_6 = arith.constant 0 : index
    %c0_7 = arith.constant 0 : index
    %8 = vector.load %arg7[%c0_6, %c0_7] : memref<16x32xf32, #tpu.memory_space<vmem>>, vector<16x32xf32>
    tpu.vector_store %arg7[%c0_6, %c0_7], %7 {strides = array<i32>} : memref<16x32xf32, #tpu.memory_space<vmem>>, vector<16x32xf32>,
    %c0_i32_8 = arith.constant 0 : i32
    %9 = arith.cmpi eq, %arg2, %c0_i32_8 : i32
    %10 = arith.extui %9 : i1 to i32
    %c0_i32_9 = arith.constant 0 : i32
    %11 = arith.cmpi ne, %10, %c0_i32_9 : i32
    scf.if %11 {
      %c0_10 = arith.constant 0 : index
      %c0_11 = arith.constant 0 : index
      %12 = vector.load %arg7[%c0_10, %c0_11] : memref<16x32xf32, #tpu.memory_space<vmem>>, vector<16x32xf32>
      %c0_12 = arith.constant 0 : index
      %c0_13 = arith.constant 0 : index
      %13 = vector.load %arg5[%c0_12, %c0_13] : memref<1x32xf32, #tpu.memory_space<vmem>>, vector<1x32xf32>
      %14 = vector.broadcast %13 : vector<1x32xf32> to vector<16x32xf32>
      %15 = arith.addf %12, %14 : vector<16x32xf32>
      %16 = arith.truncf %15 : vector<16x32xf32> to vector<16x32xbf16>
      %c0_14 = arith.constant 0 : index
      %c0_15 = arith.constant 0 : index
      %17 = vector.load %arg6[%c0_14, %c0_15] : memref<16x32xbf16, #tpu.memory_space<vmem>>, vector<16x32xbf16>
      tpu.vector_store %arg6[%c0_14, %c0_15], %16 {strides = array<i32>} : memref<16x32xbf16, #tpu.memory_space<vmem>>, vector<16x32xbf16>,
    } else {
    }
    return
  }
  func.func @transform_0(%arg0: i32, %arg1: i32, %arg2: i32) -> (i32, i32) {
    %c0_i32 = arith.constant 0 : i32
    return %arg0, %arg2 : i32, i32
  }
  func.func @transform_1(%arg0: i32, %arg1: i32, %arg2: i32) -> (i32, i32) {
    %c0_i32 = arith.constant 0 : i32
    return %arg2, %arg1 : i32, i32
  }
  func.func @transform_2(%arg0: i32, %arg1: i32, %arg2: i32) -> (i32, i32) {
    %c0_i32 = arith.constant 0 : i32
    %c0_i32_0 = arith.constant 0 : i32
    return %c0_i32, %arg1 : i32, i32
  }
  func.func @transform_3(%arg0: i32, %arg1: i32, %arg2: i32) -> (i32, i32) {
    %c0_i32 = arith.constant 0 : i32
    return %arg0, %arg1 : i32, i32
  }
}

module attributes {stable_mosaic.version = 11 : i64} {
  func.func @_res_ln_kernel(%arg0: i32, %arg1: memref<16x32xbf16, #tpu.memory_space<vmem>>, %arg2: memref<16x32xbf16, #tpu.memory_space<vmem>>, %arg3: memref<1x32xf32, #tpu.memory_space<vmem>>, %arg4: memref<1x32xf32, #tpu.memory_space<vmem>>, %arg5: memref<16x32xbf16, #tpu.memory_space<vmem>>) attributes {dimension_semantics = [#tpu.dimension_semantics<parallel>], iteration_bounds = array<i64: 1>, scalar_prefetch = 0 : i64, scratch_operands = 0 : i64, tpu.core_type = #tpu.core_type<tc>, window_params = [{transform_indices = @transform_0, window_bounds = array<i64: 16, 32>}, {transform_indices = @transform_1, window_bounds = array<i64: 16, 32>}, {pipeline_mode = #tpu.pipeline_mode<synchronous>, transform_indices = @transform_2, window_bounds = array<i64: 1, 32>}, {pipeline_mode = #tpu.pipeline_mode<synchronous>, transform_indices = @transform_3, window_bounds = array<i64: 1, 32>}, {transform_indices = @transform_4, window_bounds = array<i64: 16, 32>}]} {
    %c0 = arith.constant 0 : index
    %c0_0 = arith.constant 0 : index
    %0 = vector.load %arg1[%c0, %c0_0] : memref<16x32xbf16, #tpu.memory_space<vmem>>, vector<16x32xbf16>
    %1 = arith.extf %0 : vector<16x32xbf16> to vector<16x32xf32>
    %c0_1 = arith.constant 0 : index
    %c0_2 = arith.constant 0 : index
    %2 = vector.load %arg2[%c0_1, %c0_2] : memref<16x32xbf16, #tpu.memory_space<vmem>>, vector<16x32xbf16>
    %3 = arith.extf %2 : vector<16x32xbf16> to vector<16x32xf32>
    %4 = arith.addf %1, %3 : vector<16x32xf32>
    %cst = arith.constant dense<0.000000e+00> : vector<16xf32>
    %5 = vector.multi_reduction <add>, %4, %cst [1] : vector<16x32xf32> to vector<16xf32>
    %6 = vector.shape_cast %5 : vector<16xf32> to vector<16x1xf32>
    %cst_3 = arith.constant 3.200000e+01 : f32
    %7 = vector.broadcast %cst_3 : f32 to vector<16x1xf32>
    %8 = arith.divf %6, %7 : vector<16x1xf32>
    %9 = vector.broadcast %8 : vector<16x1xf32> to vector<16x32xf32>
    %10 = arith.subf %4, %9 : vector<16x32xf32>
    %11 = arith.mulf %10, %10 : vector<16x32xf32>
    %cst_4 = arith.constant dense<0.000000e+00> : vector<16xf32>
    %12 = vector.multi_reduction <add>, %11, %cst_4 [1] : vector<16x32xf32> to vector<16xf32>
    %13 = vector.shape_cast %12 : vector<16xf32> to vector<16x1xf32>
    %cst_5 = arith.constant 3.200000e+01 : f32
    %14 = vector.broadcast %cst_5 : f32 to vector<16x1xf32>
    %15 = arith.divf %13, %14 : vector<16x1xf32>
    %16 = vector.broadcast %8 : vector<16x1xf32> to vector<16x32xf32>
    %17 = arith.subf %4, %16 : vector<16x32xf32>
    %cst_6 = arith.constant 9.99999996E-13 : f32
    %18 = vector.broadcast %cst_6 : f32 to vector<16x1xf32>
    %19 = arith.addf %15, %18 : vector<16x1xf32>
    %20 = math.rsqrt %19 : vector<16x1xf32>
    %21 = vector.broadcast %20 : vector<16x1xf32> to vector<16x32xf32>
    %22 = arith.mulf %17, %21 : vector<16x32xf32>
    %c0_7 = arith.constant 0 : index
    %c0_8 = arith.constant 0 : index
    %23 = vector.load %arg3[%c0_7, %c0_8] : memref<1x32xf32, #tpu.memory_space<vmem>>, vector<1x32xf32>
    %24 = vector.broadcast %23 : vector<1x32xf32> to vector<16x32xf32>
    %25 = arith.mulf %22, %24 : vector<16x32xf32>
    %c0_9 = arith.constant 0 : index
    %c0_10 = arith.constant 0 : index
    %26 = vector.load %arg4[%c0_9, %c0_10] : memref<1x32xf32, #tpu.memory_space<vmem>>, vector<1x32xf32>
    %27 = vector.broadcast %26 : vector<1x32xf32> to vector<16x32xf32>
    %28 = arith.addf %25, %27 : vector<16x32xf32>
    %29 = arith.truncf %28 : vector<16x32xf32> to vector<16x32xbf16>
    %c0_11 = arith.constant 0 : index
    %c0_12 = arith.constant 0 : index
    %30 = vector.load %arg5[%c0_11, %c0_12] : memref<16x32xbf16, #tpu.memory_space<vmem>>, vector<16x32xbf16>
    tpu.vector_store %arg5[%c0_11, %c0_12], %29 {strides = array<i32>} : memref<16x32xbf16, #tpu.memory_space<vmem>>, vector<16x32xbf16>,
    return
  }
  func.func @transform_0(%arg0: i32) -> (i32, i32) {
    %c0_i32 = arith.constant 0 : i32
    %c0_i32_0 = arith.constant 0 : i32
    return %arg0, %c0_i32 : i32, i32
  }
  func.func @transform_1(%arg0: i32) -> (i32, i32) {
    %c0_i32 = arith.constant 0 : i32
    %c0_i32_0 = arith.constant 0 : i32
    return %arg0, %c0_i32 : i32, i32
  }
  func.func @transform_2(%arg0: i32) -> (i32, i32) {
    %c0_i32 = arith.constant 0 : i32
    %c0_i32_0 = arith.constant 0 : i32
    %c0_i32_1 = arith.constant 0 : i32
    return %c0_i32, %c0_i32_0 : i32, i32
  }
  func.func @transform_3(%arg0: i32) -> (i32, i32) {
    %c0_i32 = arith.constant 0 : i32
    %c0_i32_0 = arith.constant 0 : i32
    %c0_i32_1 = arith.constant 0 : i32
    return %c0_i32, %c0_i32_0 : i32, i32
  }
  func.func @transform_4(%arg0: i32) -> (i32, i32) {
    %c0_i32 = arith.constant 0 : i32
    %c0_i32_0 = arith.constant 0 : i32
    return %arg0, %c0_i32 : i32, i32
  }
}

module attributes {stable_mosaic.version = 11 : i64} {
  func.func @_dense_kernel(%arg0: i32, %arg1: i32, %arg2: i32, %arg3: memref<16x32xbf16, #tpu.memory_space<vmem>>, %arg4: memref<128x32xbf16, #tpu.memory_space<vmem>>, %arg5: memref<1x128xf32, #tpu.memory_space<vmem>>, %arg6: memref<16x128xf32, #tpu.memory_space<vmem>>, %arg7: memref<16x128xf32, #tpu.memory_space<vmem>>) attributes {dimension_semantics = [#tpu.dimension_semantics<parallel>, #tpu.dimension_semantics<parallel>, #tpu.dimension_semantics<arbitrary>], iteration_bounds = array<i64: 1, 1, 1>, scalar_prefetch = 0 : i64, scratch_operands = 1 : i64, tpu.core_type = #tpu.core_type<tc>, window_params = [{transform_indices = @transform_0, window_bounds = array<i64: 16, 32>}, {transform_indices = @transform_1, window_bounds = array<i64: 128, 32>}, {transform_indices = @transform_2, window_bounds = array<i64: 1, 128>}, {transform_indices = @transform_3, window_bounds = array<i64: 16, 128>}]} {
    %c0_i32 = arith.constant 0 : i32
    %0 = arith.cmpi eq, %arg2, %c0_i32 : i32
    %1 = arith.extui %0 : i1 to i32
    %c0_i32_0 = arith.constant 0 : i32
    %2 = arith.cmpi ne, %1, %c0_i32_0 : i32
    scf.if %2 {
      %cst_10 = arith.constant 0.000000e+00 : f32
      %12 = vector.broadcast %cst_10 : f32 to vector<16x128xf32>
      %c0_11 = arith.constant 0 : index
      %c0_12 = arith.constant 0 : index
      %13 = vector.load %arg7[%c0_11, %c0_12] : memref<16x128xf32, #tpu.memory_space<vmem>>, vector<16x128xf32>
      tpu.vector_store %arg7[%c0_11, %c0_12], %12 {strides = array<i32>} : memref<16x128xf32, #tpu.memory_space<vmem>>, vector<16x128xf32>,
    } else {
    }
    %c0 = arith.constant 0 : index
    %c0_1 = arith.constant 0 : index
    %3 = vector.load %arg7[%c0, %c0_1] : memref<16x128xf32, #tpu.memory_space<vmem>>, vector<16x128xf32>
    %c0_2 = arith.constant 0 : index
    %c0_3 = arith.constant 0 : index
    %4 = vector.load %arg3[%c0_2, %c0_3] : memref<16x32xbf16, #tpu.memory_space<vmem>>, vector<16x32xbf16>
    %c0_4 = arith.constant 0 : index
    %c0_5 = arith.constant 0 : index
    %5 = vector.load %arg4[%c0_4, %c0_5] : memref<128x32xbf16, #tpu.memory_space<vmem>>, vector<128x32xbf16>
    %cst = arith.constant dense<0.000000e+00> : vector<16x128xf32>
    %6 = tpu.matmul %4, %5, %cst {dimension_numbers = #tpu.dot_dimension_numbers<[1], [1], [0], [0], [0, 0, 1, 0], [], []>} : vector<16x32xbf16>, vector<128x32xbf16>, vector<16x128xf32> -> vector<16x128xf32>
    %7 = arith.addf %3, %6 : vector<16x128xf32>
    %c0_6 = arith.constant 0 : index
    %c0_7 = arith.constant 0 : index
    %8 = vector.load %arg7[%c0_6, %c0_7] : memref<16x128xf32, #tpu.memory_space<vmem>>, vector<16x128xf32>
    tpu.vector_store %arg7[%c0_6, %c0_7], %7 {strides = array<i32>} : memref<16x128xf32, #tpu.memory_space<vmem>>, vector<16x128xf32>,
    %c0_i32_8 = arith.constant 0 : i32
    %9 = arith.cmpi eq, %arg2, %c0_i32_8 : i32
    %10 = arith.extui %9 : i1 to i32
    %c0_i32_9 = arith.constant 0 : i32
    %11 = arith.cmpi ne, %10, %c0_i32_9 : i32
    scf.if %11 {
      %c0_10 = arith.constant 0 : index
      %c0_11 = arith.constant 0 : index
      %12 = vector.load %arg7[%c0_10, %c0_11] : memref<16x128xf32, #tpu.memory_space<vmem>>, vector<16x128xf32>
      %c0_12 = arith.constant 0 : index
      %c0_13 = arith.constant 0 : index
      %13 = vector.load %arg5[%c0_12, %c0_13] : memref<1x128xf32, #tpu.memory_space<vmem>>, vector<1x128xf32>
      %14 = vector.broadcast %13 : vector<1x128xf32> to vector<16x128xf32>
      %15 = arith.addf %12, %14 : vector<16x128xf32>
      %c0_14 = arith.constant 0 : index
      %c0_15 = arith.constant 0 : index
      %16 = vector.load %arg6[%c0_14, %c0_15] : memref<16x128xf32, #tpu.memory_space<vmem>>, vector<16x128xf32>
      tpu.vector_store %arg6[%c0_14, %c0_15], %15 {strides = array<i32>} : memref<16x128xf32, #tpu.memory_space<vmem>>, vector<16x128xf32>,
    } else {
    }
    return
  }
  func.func @transform_0(%arg0: i32, %arg1: i32, %arg2: i32) -> (i32, i32) {
    %c0_i32 = arith.constant 0 : i32
    return %arg0, %arg2 : i32, i32
  }
  func.func @transform_1(%arg0: i32, %arg1: i32, %arg2: i32) -> (i32, i32) {
    %c0_i32 = arith.constant 0 : i32
    return %arg1, %arg2 : i32, i32
  }
  func.func @transform_2(%arg0: i32, %arg1: i32, %arg2: i32) -> (i32, i32) {
    %c0_i32 = arith.constant 0 : i32
    %c0_i32_0 = arith.constant 0 : i32
    return %c0_i32, %arg1 : i32, i32
  }
  func.func @transform_3(%arg0: i32, %arg1: i32, %arg2: i32) -> (i32, i32) {
    %c0_i32 = arith.constant 0 : i32
    return %arg0, %arg1 : i32, i32
  }
}

module attributes {stable_mosaic.version = 11 : i64} {
  func.func @_dense_kernel(%arg0: i32, %arg1: i32, %arg2: i32, %arg3: memref<16x64xbf16, #tpu.memory_space<vmem>>, %arg4: memref<64x32xbf16, #tpu.memory_space<vmem>>, %arg5: memref<1x32xf32, #tpu.memory_space<vmem>>, %arg6: memref<16x32xbf16, #tpu.memory_space<vmem>>, %arg7: memref<16x32xf32, #tpu.memory_space<vmem>>) attributes {dimension_semantics = [#tpu.dimension_semantics<parallel>, #tpu.dimension_semantics<parallel>, #tpu.dimension_semantics<arbitrary>], iteration_bounds = array<i64: 1, 1, 1>, scalar_prefetch = 0 : i64, scratch_operands = 1 : i64, tpu.core_type = #tpu.core_type<tc>, window_params = [{transform_indices = @transform_0, window_bounds = array<i64: 16, 64>}, {transform_indices = @transform_1, window_bounds = array<i64: 64, 32>}, {transform_indices = @transform_2, window_bounds = array<i64: 1, 32>}, {transform_indices = @transform_3, window_bounds = array<i64: 16, 32>}]} {
    %c0_i32 = arith.constant 0 : i32
    %0 = arith.cmpi eq, %arg2, %c0_i32 : i32
    %1 = arith.extui %0 : i1 to i32
    %c0_i32_0 = arith.constant 0 : i32
    %2 = arith.cmpi ne, %1, %c0_i32_0 : i32
    scf.if %2 {
      %cst_10 = arith.constant 0.000000e+00 : f32
      %12 = vector.broadcast %cst_10 : f32 to vector<16x32xf32>
      %c0_11 = arith.constant 0 : index
      %c0_12 = arith.constant 0 : index
      %13 = vector.load %arg7[%c0_11, %c0_12] : memref<16x32xf32, #tpu.memory_space<vmem>>, vector<16x32xf32>
      tpu.vector_store %arg7[%c0_11, %c0_12], %12 {strides = array<i32>} : memref<16x32xf32, #tpu.memory_space<vmem>>, vector<16x32xf32>,
    } else {
    }
    %c0 = arith.constant 0 : index
    %c0_1 = arith.constant 0 : index
    %3 = vector.load %arg7[%c0, %c0_1] : memref<16x32xf32, #tpu.memory_space<vmem>>, vector<16x32xf32>
    %c0_2 = arith.constant 0 : index
    %c0_3 = arith.constant 0 : index
    %4 = vector.load %arg3[%c0_2, %c0_3] : memref<16x64xbf16, #tpu.memory_space<vmem>>, vector<16x64xbf16>
    %c0_4 = arith.constant 0 : index
    %c0_5 = arith.constant 0 : index
    %5 = vector.load %arg4[%c0_4, %c0_5] : memref<64x32xbf16, #tpu.memory_space<vmem>>, vector<64x32xbf16>
    %cst = arith.constant dense<0.000000e+00> : vector<16x32xf32>
    %6 = tpu.matmul %4, %5, %cst {dimension_numbers = #tpu.dot_dimension_numbers<[1], [0], [0], [1], [0, 0, 1, 1], [], []>} : vector<16x64xbf16>, vector<64x32xbf16>, vector<16x32xf32> -> vector<16x32xf32>
    %7 = arith.addf %3, %6 : vector<16x32xf32>
    %c0_6 = arith.constant 0 : index
    %c0_7 = arith.constant 0 : index
    %8 = vector.load %arg7[%c0_6, %c0_7] : memref<16x32xf32, #tpu.memory_space<vmem>>, vector<16x32xf32>
    tpu.vector_store %arg7[%c0_6, %c0_7], %7 {strides = array<i32>} : memref<16x32xf32, #tpu.memory_space<vmem>>, vector<16x32xf32>,
    %c0_i32_8 = arith.constant 0 : i32
    %9 = arith.cmpi eq, %arg2, %c0_i32_8 : i32
    %10 = arith.extui %9 : i1 to i32
    %c0_i32_9 = arith.constant 0 : i32
    %11 = arith.cmpi ne, %10, %c0_i32_9 : i32
    scf.if %11 {
      %c0_10 = arith.constant 0 : index
      %c0_11 = arith.constant 0 : index
      %12 = vector.load %arg7[%c0_10, %c0_11] : memref<16x32xf32, #tpu.memory_space<vmem>>, vector<16x32xf32>
      %c0_12 = arith.constant 0 : index
      %c0_13 = arith.constant 0 : index
      %13 = vector.load %arg5[%c0_12, %c0_13] : memref<1x32xf32, #tpu.memory_space<vmem>>, vector<1x32xf32>
      %14 = vector.broadcast %13 : vector<1x32xf32> to vector<16x32xf32>
      %15 = arith.addf %12, %14 : vector<16x32xf32>
      %16 = arith.truncf %15 : vector<16x32xf32> to vector<16x32xbf16>
      %c0_14 = arith.constant 0 : index
      %c0_15 = arith.constant 0 : index
      %17 = vector.load %arg6[%c0_14, %c0_15] : memref<16x32xbf16, #tpu.memory_space<vmem>>, vector<16x32xbf16>
      tpu.vector_store %arg6[%c0_14, %c0_15], %16 {strides = array<i32>} : memref<16x32xbf16, #tpu.memory_space<vmem>>, vector<16x32xbf16>,
    } else {
    }
    return
  }
  func.func @transform_0(%arg0: i32, %arg1: i32, %arg2: i32) -> (i32, i32) {
    %c0_i32 = arith.constant 0 : i32
    return %arg0, %arg2 : i32, i32
  }
  func.func @transform_1(%arg0: i32, %arg1: i32, %arg2: i32) -> (i32, i32) {
    %c0_i32 = arith.constant 0 : i32
    return %arg2, %arg1 : i32, i32
  }
  func.func @transform_2(%arg0: i32, %arg1: i32, %arg2: i32) -> (i32, i32) {
    %c0_i32 = arith.constant 0 : i32
    %c0_i32_0 = arith.constant 0 : i32
    return %c0_i32, %arg1 : i32, i32
  }
  func.func @transform_3(%arg0: i32, %arg1: i32, %arg2: i32) -> (i32, i32) {
    %c0_i32 = arith.constant 0 : i32
    return %arg0, %arg1 : i32, i32
  }
}

module attributes {stable_mosaic.version = 11 : i64} {
  func.func @_dense_kernel(%arg0: i32, %arg1: i32, %arg2: i32, %arg3: memref<16x32xbf16, #tpu.memory_space<vmem>>, %arg4: memref<32x64xbf16, #tpu.memory_space<vmem>>, %arg5: memref<1x64xf32, #tpu.memory_space<vmem>>, %arg6: memref<16x64xbf16, #tpu.memory_space<vmem>>, %arg7: memref<16x64xf32, #tpu.memory_space<vmem>>) attributes {dimension_semantics = [#tpu.dimension_semantics<parallel>, #tpu.dimension_semantics<parallel>, #tpu.dimension_semantics<arbitrary>], iteration_bounds = array<i64: 1, 1, 1>, scalar_prefetch = 0 : i64, scratch_operands = 1 : i64, tpu.core_type = #tpu.core_type<tc>, window_params = [{transform_indices = @transform_0, window_bounds = array<i64: 16, 32>}, {transform_indices = @transform_1, window_bounds = array<i64: 32, 64>}, {transform_indices = @transform_2, window_bounds = array<i64: 1, 64>}, {transform_indices = @transform_3, window_bounds = array<i64: 16, 64>}]} {
    %c0_i32 = arith.constant 0 : i32
    %0 = arith.cmpi eq, %arg2, %c0_i32 : i32
    %1 = arith.extui %0 : i1 to i32
    %c0_i32_0 = arith.constant 0 : i32
    %2 = arith.cmpi ne, %1, %c0_i32_0 : i32
    scf.if %2 {
      %cst_10 = arith.constant 0.000000e+00 : f32
      %12 = vector.broadcast %cst_10 : f32 to vector<16x64xf32>
      %c0_11 = arith.constant 0 : index
      %c0_12 = arith.constant 0 : index
      %13 = vector.load %arg7[%c0_11, %c0_12] : memref<16x64xf32, #tpu.memory_space<vmem>>, vector<16x64xf32>
      tpu.vector_store %arg7[%c0_11, %c0_12], %12 {strides = array<i32>} : memref<16x64xf32, #tpu.memory_space<vmem>>, vector<16x64xf32>,
    } else {
    }
    %c0 = arith.constant 0 : index
    %c0_1 = arith.constant 0 : index
    %3 = vector.load %arg7[%c0, %c0_1] : memref<16x64xf32, #tpu.memory_space<vmem>>, vector<16x64xf32>
    %c0_2 = arith.constant 0 : index
    %c0_3 = arith.constant 0 : index
    %4 = vector.load %arg3[%c0_2, %c0_3] : memref<16x32xbf16, #tpu.memory_space<vmem>>, vector<16x32xbf16>
    %c0_4 = arith.constant 0 : index
    %c0_5 = arith.constant 0 : index
    %5 = vector.load %arg4[%c0_4, %c0_5] : memref<32x64xbf16, #tpu.memory_space<vmem>>, vector<32x64xbf16>
    %cst = arith.constant dense<0.000000e+00> : vector<16x64xf32>
    %6 = tpu.matmul %4, %5, %cst {dimension_numbers = #tpu.dot_dimension_numbers<[1], [0], [0], [1], [0, 0, 1, 1], [], []>} : vector<16x32xbf16>, vector<32x64xbf16>, vector<16x64xf32> -> vector<16x64xf32>
    %7 = arith.addf %3, %6 : vector<16x64xf32>
    %c0_6 = arith.constant 0 : index
    %c0_7 = arith.constant 0 : index
    %8 = vector.load %arg7[%c0_6, %c0_7] : memref<16x64xf32, #tpu.memory_space<vmem>>, vector<16x64xf32>
    tpu.vector_store %arg7[%c0_6, %c0_7], %7 {strides = array<i32>} : memref<16x64xf32, #tpu.memory_space<vmem>>, vector<16x64xf32>,
    %c0_i32_8 = arith.constant 0 : i32
    %9 = arith.cmpi eq, %arg2, %c0_i32_8 : i32
    %10 = arith.extui %9 : i1 to i32
    %c0_i32_9 = arith.constant 0 : i32
    %11 = arith.cmpi ne, %10, %c0_i32_9 : i32
    scf.if %11 {
      %c0_10 = arith.constant 0 : index
      %c0_11 = arith.constant 0 : index
      %12 = vector.load %arg7[%c0_10, %c0_11] : memref<16x64xf32, #tpu.memory_space<vmem>>, vector<16x64xf32>
      %c0_12 = arith.constant 0 : index
      %c0_13 = arith.constant 0 : index
      %13 = vector.load %arg5[%c0_12, %c0_13] : memref<1x64xf32, #tpu.memory_space<vmem>>, vector<1x64xf32>
      %14 = vector.broadcast %13 : vector<1x64xf32> to vector<16x64xf32>
      %15 = arith.addf %12, %14 : vector<16x64xf32>
      %cst_14 = arith.constant 5.000000e-01 : f32
      %16 = vector.broadcast %cst_14 : f32 to vector<16x64xf32>
      %17 = arith.mulf %16, %15 : vector<16x64xf32>
      %cst_15 = arith.constant 4.471500e-02 : f32
      %18 = vector.broadcast %cst_15 : f32 to vector<16x64xf32>
      %19 = arith.mulf %18, %15 : vector<16x64xf32>
      %20 = arith.mulf %19, %15 : vector<16x64xf32>
      %21 = arith.mulf %20, %15 : vector<16x64xf32>
      %22 = arith.addf %15, %21 : vector<16x64xf32>
      %cst_16 = arith.constant 0.797884583 : f32
      %23 = vector.broadcast %cst_16 : f32 to vector<16x64xf32>
      %24 = arith.mulf %23, %22 : vector<16x64xf32>
      %25 = math.tanh %24 : vector<16x64xf32>
      %cst_17 = arith.constant 1.000000e+00 : f32
      %26 = vector.broadcast %cst_17 : f32 to vector<16x64xf32>
      %27 = arith.addf %26, %25 : vector<16x64xf32>
      %28 = arith.mulf %17, %27 : vector<16x64xf32>
      %29 = arith.truncf %28 : vector<16x64xf32> to vector<16x64xbf16>
      %c0_18 = arith.constant 0 : index
      %c0_19 = arith.constant 0 : index
      %30 = vector.load %arg6[%c0_18, %c0_19] : memref<16x64xbf16, #tpu.memory_space<vmem>>, vector<16x64xbf16>
      tpu.vector_store %arg6[%c0_18, %c0_19], %29 {strides = array<i32>} : memref<16x64xbf16, #tpu.memory_space<vmem>>, vector<16x64xbf16>,
    } else {
    }
    return
  }
  func.func @transform_0(%arg0: i32, %arg1: i32, %arg2: i32) -> (i32, i32) {
    %c0_i32 = arith.constant 0 : i32
    return %arg0, %arg2 : i32, i32
  }
  func.func @transform_1(%arg0: i32, %arg1: i32, %arg2: i32) -> (i32, i32) {
    %c0_i32 = arith.constant 0 : i32
    return %arg2, %arg1 : i32, i32
  }
  func.func @transform_2(%arg0: i32, %arg1: i32, %arg2: i32) -> (i32, i32) {
    %c0_i32 = arith.constant 0 : i32
    %c0_i32_0 = arith.constant 0 : i32
    return %c0_i32, %arg1 : i32, i32
  }
  func.func @transform_3(%arg0: i32, %arg1: i32, %arg2: i32) -> (i32, i32) {
    %c0_i32 = arith.constant 0 : i32
    return %arg0, %arg1 : i32, i32
  }
}

</mosaic_0001>

<llo_original>
// kernel: bert_pretrain_forward.15
$region0: #{bert_pretrain_forward.15}
  #allocation0 [shape = 'u32[]', space=smem, size = 0x4, offset = 0x4, fixed_abs, tag = 'smem constant byte address 0x4 - core index']
  #allocation1 [shape = 'u32[144,128]{1,0:T(1,128)}', space=vmem, size = 0x12000, scoped, tag = 'internal scratch']
  #allocation2 [shape = 'f32[16,96]{1,0:T(8,128)}', space=vmem, size = 0x2000, scoped, tag = 'scratch operand']
  %s0 = inlined_call_operand.vmem [shape: bf16[16,32], index: 0, kind: input, shape index: {}]
  %s1 = inlined_call_operand.vmem [shape: bf16[32,96], index: 1, kind: input, shape index: {}]
  %s2 = inlined_call_operand.vmem [shape: f32[1,96], index: 2, kind: input, shape index: {}]
  %s3 = inlined_call_operand.vmem [shape: bf16[16,96], index: 3, kind: output, shape index: {}]
  %s4 = sld [smem:[#allocation0]]
  $region30: #{bert_pretrain_forward.15} parent=0
    _
  %s6 = ssub.s32 1, %s4
  %s7 = scalar_select 0, %s6, %s4
  // Predicated region
  $region2: #{bert_pretrain_forward.15} parent=0 // pred_check
    _
  $region3: #{bert_pretrain_forward.15} parent=0 // pred_check_branch
    %9 = sbr.rel (0) target = $region5
  $region4: #{bert_pretrain_forward.15} parent=0 // pred_region
    _
  $region5: #{bert_pretrain_forward.15} parent=0 // pred_fallthru
    _
  // Predicated region
  $region6: #{bert_pretrain_forward.15} parent=0 // pred_check
    _
  $region7: #{bert_pretrain_forward.15} parent=0 // pred_check_branch
    %11 = sbr.rel (0) target = $region9
  $region8: #{bert_pretrain_forward.15} parent=0 // pred_region
    _
  $region9: #{bert_pretrain_forward.15} parent=0 // pred_fallthru
    _
  // Predicated region
  $region10: #{bert_pretrain_forward.15} parent=0 // pred_check
    _
  $region11: #{bert_pretrain_forward.15} parent=0 // pred_check_branch
    %13 = sbr.rel (0) target = $region13
  $region12: #{bert_pretrain_forward.15} parent=0 // pred_region
    _
  $region13: #{bert_pretrain_forward.15} parent=0 // pred_fallthru
    _
  %p15 = scmp.eq.s32.totalorder 0, 0
  // Predicated region
  $region14: #{bert_pretrain_forward.15} parent=0 // pred_check
    %p16 = pneg %p15
  $region15: #{bert_pretrain_forward.15} parent=0 // pred_check_branch
    %18 = sbr.rel (%p16) target = $region17
  $region16: #{bert_pretrain_forward.15} parent=0 // pred_region
    %vm19 = vcmask 785408
    %20 = vst.msk [vmem:[#allocation2] sm:$0xff] %vm19, 0.0
    %21 = vst.msk [vmem:[#allocation2 + $0x8] sm:$0xff] %vm19, 0.0
  $region17: #{bert_pretrain_forward.15} parent=0 // pred_fallthru
    _
  %v22 = vld [vmem:[#allocation2] sm:$0xff]
  %v23 = vld [vmem:[#allocation2 + $0x8] sm:$0xff]
  %v24 = vld [vmem:[%s0] sm:$0xf]
  %v25 = vld [vmem:[%s0 + $0x4] sm:$0xf]
  %v26 = vld [vmem:[%s1] sm:$0xf]
  %v27 = vld [vmem:[%s1 + $0x4] sm:$0xf]
  %v28 = vld [vmem:[%s1 + $0x8] sm:$0xf]
  %v29 = vld [vmem:[%s1 + $0xc] sm:$0xf]
  %v32 = vunpack.c.l.b16 %v24
  %v33 = vunpack.c.l.b16 %v25
  %v34 = vpack.c.b16 %v33, %v32
  %v39 = vunpack.c.l.b16 %v26
  %v40 = vunpack.c.l.b16 %v27
  %v41 = vunpack.c.l.b16 %v28
  %v42 = vunpack.c.l.b16 %v29
  %v43 = vpack.c.b16 %v40, %v39
  %v44 = vpack.c.b16 %v42, %v41
  %vm47 = vcmask 261120
  %v49 = vsel %vm47, %v34, 0
  %51 = vmatprep.subr.bf16.mxu0 0
  %52 = vmatpush1.bf16.msra.mxu0 %v43
  %53 = vmatprep.subr.bf16.mxu0 0
  %54 = vmatpush1.bf16.msra.mxu0 %v44
  %55 = vmatprep.subr.bf16.mxu0 0
  %56 = vmatpush1.bf16.msra.mxu0 0
  %57 = vmatprep.subr.bf16.mxu0 0
  %58 = vmatpush1.bf16.msra.mxu0 0
  %59 = vmatprep.subr.bf16.mxu0 0
  %60 = vmatpush1.bf16.msra.mxu0 0
  %61 = vmatprep.subr.bf16.mxu0 0
  %62 = vmatpush1.bf16.msra.mxu0 0
  %63 = vmatprep.subr.bf16.mxu0 0
  %64 = vmatpush1.bf16.msra.mxu0 0
  %65 = vmatprep.subr.bf16.mxu0 0
  %66 = vmatpush1.bf16.msra.mxu0 0
  %67 = vmatprep.subr.bf16.mxu0 0
  %68 = vmatpush1.bf16.msra.mxu0 0
  %69 = vmatprep.subr.bf16.mxu0 0
  %70 = vmatpush1.bf16.msra.mxu0 0
  %71 = vmatprep.subr.bf16.mxu0 0
  %72 = vmatpush1.bf16.msra.mxu0 0
  %73 = vmatprep.subr.bf16.mxu0 0
  %74 = vmatpush1.bf16.msra.mxu0 0
  %75 = vmatprep.subr.bf16.mxu0 0
  %76 = vmatpush1.bf16.msra.mxu0 0
  %77 = vmatprep.subr.bf16.mxu0 0
  %78 = vmatpush1.bf16.msra.mxu0 0
  %79 = vmatprep.subr.bf16.mxu0 0
  %80 = vmatpush1.bf16.msra.mxu0 0
  %81 = vmatprep.subr.bf16.mxu0 0
  %82 = vmatpush1.bf16.msra.mxu0 0
  %83 = vmatprep.mubr.bf16.mxu0 0
  %84 = vmatmul.mubr.bf16.gmra.mrb[0].mxu0 %v49
  %v85 = vpop.f32.mrb[0].mxu0
  %v86 = vadd.f32 0.0, %v85
  %v87 = vpop.f32.mrb[0].mxu0
  %v88 = vpop.f32.mrb[0].mxu0
  %v89 = vadd.f32 0.0, %v88
  %v90 = vpop.f32.mrb[0].mxu0
  %91 = vdwg.mxu0
  %v92 = vadd.f32 %v22, %v86
  %v93 = vadd.f32 %v23, %v89
  %vm94 = vcmask 785408
  %95 = vst.msk [vmem:[#allocation2] sm:$0xff] %vm94, %v92
  %96 = vst.msk [vmem:[#allocation2 + $0x8] sm:$0xff] %vm94, %v93
  // Predicated region
  $region18: #{bert_pretrain_forward.15} parent=0 // pred_check
    %p97 = pneg %p15
  $region19: #{bert_pretrain_forward.15} parent=0 // pred_check_branch
    %99 = sbr.rel (%p97) target = $region21
  $region20: #{bert_pretrain_forward.15} parent=0 // pred_region
    %v100 = vld [vmem:[#allocation2] sm:$0xff]
    %v101 = vld [vmem:[#allocation2 + $0x8] sm:$0xff]
    %v102 = vld [vmem:[%s2] sm:$0x1]
    %v104 = vlaneseq
    %v105 = vshrl.u32 %v104, 7
    %v106 = vsub.s32 0, %v105
    %v107 = vrot.slane %v102, %v106
    %v109 = vadd.f32 %v100, %v107
    %v110 = vadd.f32 %v101, %v107
    %v111 = vpack.c.bf16 %v110, %v109
    %v113 = vunpack.c.l.b16 %v111
    %v114 = vunpack.c.h.b16 %v111
    %v115 = vpack.c.b16 %v113, %v113
    %v116 = vpack.c.b16 %v114, %v114
    %vm119 = vcmask 781312
    %120 = vst.msk [vmem:[%s3] sm:$0xf] %vm119, %v115
    %121 = vst.msk [vmem:[%s3 + $0x4] sm:$0xf] %vm119, %v116
  $region21: #{bert_pretrain_forward.15} parent=0 // pred_fallthru
    _
  // Predicated region
  $region22: #{bert_pretrain_forward.15} parent=0 // pred_check
    _
  $region23: #{bert_pretrain_forward.15} parent=0 // pred_check_branch
    %123 = sbr.rel (0) target = $region25
  $region24: #{bert_pretrain_forward.15} parent=0 // pred_region
    _
  $region25: #{bert_pretrain_forward.15} parent=0 // pred_fallthru
    _
  // Predicated region
  $region26: #{bert_pretrain_forward.15} parent=0 // pred_check
    _
  $region27: #{bert_pretrain_forward.15} parent=0 // pred_check_branch
    %125 = sbr.rel (0) target = $region29
  $region28: #{bert_pretrain_forward.15} parent=0 // pred_region
    _
  $region29: #{bert_pretrain_forward.15} parent=0 // pred_fallthru
    _

// kernel: bert_pretrain_forward.17
$region0: #{bert_pretrain_forward.17}
  #allocation0 [shape = 'u32[]', space=smem, size = 0x4, offset = 0x4, fixed_abs, tag = 'smem constant byte address 0x4 - core index']
  #allocation1 [shape = 'u32[144,128]{1,0:T(1,128)}', space=vmem, size = 0x12000, scoped, tag = 'internal scratch']
  #allocation2 [shape = 'f32[16,32]{1,0:T(8,128)}', space=vmem, size = 0x2000, scoped, tag = 'scratch operand']
  %s0 = inlined_call_operand.vmem [shape: bf16[16,32], index: 0, kind: input, shape index: {}]
  %s1 = inlined_call_operand.vmem [shape: bf16[32,32], index: 1, kind: input, shape index: {}]
  %s2 = inlined_call_operand.vmem [shape: f32[1,32], index: 2, kind: input, shape index: {}]
  %s3 = inlined_call_operand.vmem [shape: bf16[16,32], index: 3, kind: output, shape index: {}]
  %s4 = sld [smem:[#allocation0]]
  $region30: #{bert_pretrain_forward.17} parent=0
    _
  %s6 = ssub.s32 1, %s4
  %s7 = scalar_select 0, %s6, %s4
  // Predicated region
  $region2: #{bert_pretrain_forward.17} parent=0 // pred_check
    _
  $region3: #{bert_pretrain_forward.17} parent=0 // pred_check_branch
    %9 = sbr.rel (0) target = $region5
  $region4: #{bert_pretrain_forward.17} parent=0 // pred_region
    _
  $region5: #{bert_pretrain_forward.17} parent=0 // pred_fallthru
    _
  // Predicated region
  $region6: #{bert_pretrain_forward.17} parent=0 // pred_check
    _
  $region7: #{bert_pretrain_forward.17} parent=0 // pred_check_branch
    %11 = sbr.rel (0) target = $region9
  $region8: #{bert_pretrain_forward.17} parent=0 // pred_region
    _
  $region9: #{bert_pretrain_forward.17} parent=0 // pred_fallthru
    _
  // Predicated region
  $region10: #{bert_pretrain_forward.17} parent=0 // pred_check
    _
  $region11: #{bert_pretrain_forward.17} parent=0 // pred_check_branch
    %13 = sbr.rel (0) target = $region13
  $region12: #{bert_pretrain_forward.17} parent=0 // pred_region
    _
  $region13: #{bert_pretrain_forward.17} parent=0 // pred_fallthru
    _
  %p15 = scmp.eq.s32.totalorder 0, 0
  // Predicated region
  $region14: #{bert_pretrain_forward.17} parent=0 // pred_check
    %p16 = pneg %p15
  $region15: #{bert_pretrain_forward.17} parent=0 // pred_check_branch
    %18 = sbr.rel (%p16) target = $region17
  $region16: #{bert_pretrain_forward.17} parent=0 // pred_region
    %vm19 = vcmask 261120
    %20 = vst.msk [vmem:[#allocation2] sm:$0xff] %vm19, 0.0
    %21 = vst.msk [vmem:[#allocation2 + $0x8] sm:$0xff] %vm19, 0.0
  $region17: #{bert_pretrain_forward.17} parent=0 // pred_fallthru
    _
  %v22 = vld [vmem:[#allocation2] sm:$0xff]
  %v23 = vld [vmem:[#allocation2 + $0x8] sm:$0xff]
  %v24 = vld [vmem:[%s0] sm:$0xf]
  %v25 = vld [vmem:[%s0 + $0x4] sm:$0xf]
  %v26 = vld [vmem:[%s1] sm:$0xf]
  %v27 = vld [vmem:[%s1 + $0x4] sm:$0xf]
  %v28 = vld [vmem:[%s1 + $0x8] sm:$0xf]
  %v29 = vld [vmem:[%s1 + $0xc] sm:$0xf]
  %v32 = vunpack.c.l.b16 %v24
  %v33 = vunpack.c.l.b16 %v25
  %v34 = vpack.c.b16 %v33, %v32
  %v39 = vunpack.c.l.b16 %v26
  %v40 = vunpack.c.l.b16 %v27
  %v41 = vunpack.c.l.b16 %v28
  %v42 = vunpack.c.l.b16 %v29
  %v43 = vpack.c.b16 %v40, %v39
  %v44 = vpack.c.b16 %v42, %v41
  %vm47 = vcmask 261120
  %v49 = vsel %vm47, %v34, 0
  %51 = vmatprep.subr.bf16.mxu0 0
  %52 = vmatpush1.bf16.msra.mxu0 %v43
  %53 = vmatprep.subr.bf16.mxu0 0
  %54 = vmatpush1.bf16.msra.mxu0 %v44
  %55 = vmatprep.subr.bf16.mxu0 0
  %56 = vmatpush1.bf16.msra.mxu0 0
  %57 = vmatprep.subr.bf16.mxu0 0
  %58 = vmatpush1.bf16.msra.mxu0 0
  %59 = vmatprep.subr.bf16.mxu0 0
  %60 = vmatpush1.bf16.msra.mxu0 0
  %61 = vmatprep.subr.bf16.mxu0 0
  %62 = vmatpush1.bf16.msra.mxu0 0
  %63 = vmatprep.subr.bf16.mxu0 0
  %64 = vmatpush1.bf16.msra.mxu0 0
  %65 = vmatprep.subr.bf16.mxu0 0
  %66 = vmatpush1.bf16.msra.mxu0 0
  %67 = vmatprep.subr.bf16.mxu0 0
  %68 = vmatpush1.bf16.msra.mxu0 0
  %69 = vmatprep.subr.bf16.mxu0 0
  %70 = vmatpush1.bf16.msra.mxu0 0
  %71 = vmatprep.subr.bf16.mxu0 0
  %72 = vmatpush1.bf16.msra.mxu0 0
  %73 = vmatprep.subr.bf16.mxu0 0
  %74 = vmatpush1.bf16.msra.mxu0 0
  %75 = vmatprep.subr.bf16.mxu0 0
  %76 = vmatpush1.bf16.msra.mxu0 0
  %77 = vmatprep.subr.bf16.mxu0 0
  %78 = vmatpush1.bf16.msra.mxu0 0
  %79 = vmatprep.subr.bf16.mxu0 0
  %80 = vmatpush1.bf16.msra.mxu0 0
  %81 = vmatprep.subr.bf16.mxu0 0
  %82 = vmatpush1.bf16.msra.mxu0 0
  %83 = vmatprep.mubr.bf16.mxu0 0
  %84 = vmatmul.mubr.bf16.gmra.mrb[0].mxu0 %v49
  %v85 = vpop.f32.mrb[0].mxu0
  %v86 = vadd.f32 0.0, %v85
  %v87 = vpop.f32.mrb[0].mxu0
  %v88 = vpop.f32.mrb[0].mxu0
  %v89 = vadd.f32 0.0, %v88
  %v90 = vpop.f32.mrb[0].mxu0
  %91 = vdwg.mxu0
  %v92 = vadd.f32 %v22, %v86
  %v93 = vadd.f32 %v23, %v89
  %94 = vst.msk [vmem:[#allocation2] sm:$0xff] %vm47, %v92
  %95 = vst.msk [vmem:[#allocation2 + $0x8] sm:$0xff] %vm47, %v93
  // Predicated region
  $region18: #{bert_pretrain_forward.17} parent=0 // pred_check
    %p96 = pneg %p15
  $region19: #{bert_pretrain_forward.17} parent=0 // pred_check_branch
    %98 = sbr.rel (%p96) target = $region21
  $region20: #{bert_pretrain_forward.17} parent=0 // pred_region
    %v99 = vld [vmem:[#allocation2] sm:$0xff]
    %v100 = vld [vmem:[#allocation2 + $0x8] sm:$0xff]
    %v101 = vld [vmem:[%s2] sm:$0x1]
    %v103 = vlaneseq
    %v104 = vshrl.u32 %v103, 7
    %v105 = vsub.s32 0, %v104
    %v106 = vrot.slane %v101, %v105
    %v108 = vadd.f32 %v99, %v106
    %v109 = vadd.f32 %v100, %v106
    %v110 = vpack.c.bf16 %v109, %v108
    %v112 = vunpack.c.l.b16 %v110
    %v113 = vunpack.c.h.b16 %v110
    %v114 = vpack.c.b16 %v112, %v112
    %v115 = vpack.c.b16 %v113, %v113
    %vm118 = vcmask 257024
    %119 = vst.msk [vmem:[%s3] sm:$0xf] %vm118, %v114
    %120 = vst.msk [vmem:[%s3 + $0x4] sm:$0xf] %vm118, %v115
  $region21: #{bert_pretrain_forward.17} parent=0 // pred_fallthru
    _
  // Predicated region
  $region22: #{bert_pretrain_forward.17} parent=0 // pred_check
    _
  $region23: #{bert_pretrain_forward.17} parent=0 // pred_check_branch
    %122 = sbr.rel (0) target = $region25
  $region24: #{bert_pretrain_forward.17} parent=0 // pred_region
    _
  $region25: #{bert_pretrain_forward.17} parent=0 // pred_fallthru
    _
  // Predicated region
  $region26: #{bert_pretrain_forward.17} parent=0 // pred_check
    _
  $region27: #{bert_pretrain_forward.17} parent=0 // pred_check_branch
    %124 = sbr.rel (0) target = $region29
  $region28: #{bert_pretrain_forward.17} parent=0 // pred_region
    _
  $region29: #{bert_pretrain_forward.17} parent=0 // pred_fallthru
    _

// kernel: bert_pretrain_forward.18
$region0: #{bert_pretrain_forward.18}
  #allocation0 [shape = 'u32[]', space=smem, size = 0x4, offset = 0x4, fixed_abs, tag = 'smem constant byte address 0x4 - core index']
  #allocation1 [shape = 'u32[144,128]{1,0:T(1,128)}', space=vmem, size = 0x12000, scoped, tag = 'internal scratch']
  %s0 = inlined_call_operand.vmem [shape: bf16[16,32], index: 0, kind: input, shape index: {}]
  %s1 = inlined_call_operand.vmem [shape: bf16[16,32], index: 1, kind: input, shape index: {}]
  %s2 = inlined_call_operand.vmem [shape: f32[1,32], index: 2, kind: input, shape index: {}]
  %s3 = inlined_call_operand.vmem [shape: f32[1,32], index: 3, kind: input, shape index: {}]
  %s4 = inlined_call_operand.vmem [shape: bf16[16,32], index: 4, kind: output, shape index: {}]
  %s5 = sld [smem:[#allocation0]]
  $region26: #{bert_pretrain_forward.18} parent=0
    _
  %s7 = ssub.s32 1, %s5
  %s8 = scalar_select 0, %s7, %s5
  // Predicated region
  $region2: #{bert_pretrain_forward.18} parent=0 // pred_check
    _
  $region3: #{bert_pretrain_forward.18} parent=0 // pred_check_branch
    %10 = sbr.rel (0) target = $region5
  $region4: #{bert_pretrain_forward.18} parent=0 // pred_region
    _
  $region5: #{bert_pretrain_forward.18} parent=0 // pred_fallthru
    _
  // Predicated region
  $region6: #{bert_pretrain_forward.18} parent=0 // pred_check
    _
  $region7: #{bert_pretrain_forward.18} parent=0 // pred_check_branch
    %12 = sbr.rel (0) target = $region9
  $region8: #{bert_pretrain_forward.18} parent=0 // pred_region
    _
  $region9: #{bert_pretrain_forward.18} parent=0 // pred_fallthru
    _
  // Predicated region
  $region10: #{bert_pretrain_forward.18} parent=0 // pred_check
    _
  $region11: #{bert_pretrain_forward.18} parent=0 // pred_check_branch
    %14 = sbr.rel (0) target = $region13
  $region12: #{bert_pretrain_forward.18} parent=0 // pred_region
    _
  $region13: #{bert_pretrain_forward.18} parent=0 // pred_fallthru
    _
  // Predicated region
  $region14: #{bert_pretrain_forward.18} parent=0 // pred_check
    _
  $region15: #{bert_pretrain_forward.18} parent=0 // pred_check_branch
    %16 = sbr.rel (0) target = $region17
  $region16: #{bert_pretrain_forward.18} parent=0 // pred_region
    _
  $region17: #{bert_pretrain_forward.18} parent=0 // pred_fallthru
    _
  %v17 = vld [vmem:[%s0] sm:$0xf]
  %v18 = vld [vmem:[%s0 + $0x4] sm:$0xf]
  %v19 = vunpack.c.l.bf16 %v17
  %v20 = vunpack.c.l.bf16 %v18
  %v21 = vld [vmem:[%s1] sm:$0xf]
  %v22 = vld [vmem:[%s1 + $0x4] sm:$0xf]
  %v23 = vunpack.c.l.bf16 %v21
  %v24 = vunpack.c.l.bf16 %v22
  %v25 = vadd.f32 %v19, %v23
  %v26 = vadd.f32 %v20, %v24
  %vm27 = vcmask 261120
  %v28 = vsel %vm27, %v25, 0.0
  %29 = vadd.xlane.f32.xlu0 %v28
  %v30 = vpop.xlane.xlu0 %29
  %v31 = vsel %vm27, %v26, 0.0
  %32 = vadd.xlane.f32.xlu0 %v31
  %v33 = vpop.xlane.xlu0 %32
  %v34 = vrcp.pop 32.0
  %v35 = vmul.f32 %v30, %v34
  %v36 = vmul.f32 %v33, %v34
  %v37 = vsub.f32 %v25, %v35
  %v38 = vsub.f32 %v26, %v36
  %v39 = vmul.f32 %v37, %v37
  %v40 = vmul.f32 %v38, %v38
  %v41 = vsel %vm27, %v39, 0.0
  %42 = vadd.xlane.f32.xlu0 %v41
  %v43 = vpop.xlane.xlu0 %42
  %v44 = vsel %vm27, %v40, 0.0
  %45 = vadd.xlane.f32.xlu0 %v44
  %v46 = vpop.xlane.xlu0 %45
  %v47 = vmul.f32 %v43, %v34
  %v48 = vmul.f32 %v46, %v34
  %v49 = vadd.f32 %v47, 1e-12
  %v50 = vadd.f32 %v48, 1e-12
  %v51 = vrsqrt.pop %v49
  %v52 = vrsqrt.pop %v50
  %v53 = vmul.f32 %v37, %v51
  %v54 = vmul.f32 %v38, %v52
  %v55 = vld [vmem:[%s2] sm:$0x1]
  %v57 = vlaneseq
  %v58 = vshrl.u32 %v57, 7
  %v59 = vsub.s32 0, %v58
  %v60 = vrot.slane %v55, %v59
  %v62 = vmul.f32 %v53, %v60
  %v63 = vmul.f32 %v54, %v60
  %v64 = vld [vmem:[%s3] sm:$0x1]
  %v66 = vlaneseq
  %v67 = vshrl.u32 %v66, 7
  %v68 = vsub.s32 0, %v67
  %v69 = vrot.slane %v64, %v68
  %v71 = vadd.f32 %v62, %v69
  %v72 = vadd.f32 %v63, %v69
  %v73 = vpack.c.bf16 %v72, %v71
  %v75 = vunpack.c.l.b16 %v73
  %v76 = vunpack.c.h.b16 %v73
  %v77 = vpack.c.b16 %v75, %v75
  %v78 = vpack.c.b16 %v76, %v76
  %vm81 = vcmask 257024
  %82 = vst.msk [vmem:[%s4] sm:$0xf] %vm81, %v77
  %83 = vst.msk [vmem:[%s4 + $0x4] sm:$0xf] %vm81, %v78
  // Predicated region
  $region18: #{bert_pretrain_forward.18} parent=0 // pred_check
    _
  $region19: #{bert_pretrain_forward.18} parent=0 // pred_check_branch
    %85 = sbr.rel (0) target = $region21
  $region20: #{bert_pretrain_forward.18} parent=0 // pred_region
    _
  $region21: #{bert_pretrain_forward.18} parent=0 // pred_fallthru
    _
  // Predicated region
  $region22: #{bert_pretrain_forward.18} parent=0 // pred_check
    _
  $region23: #{bert_pretrain_forward.18} parent=0 // pred_check_branch
    %87 = sbr.rel (0) target = $region25
  $region24: #{bert_pretrain_forward.18} parent=0 // pred_region
    _
  $region25: #{bert_pretrain_forward.18} parent=0 // pred_fallthru
    _

// kernel: bert_pretrain_forward.16
$region0: #{bert_pretrain_forward.16}
  #allocation0 [shape = 'u32[]', space=smem, size = 0x4, offset = 0x4, fixed_abs, tag = 'smem constant byte address 0x4 - core index']
  #allocation1 [shape = 'u32[144,128]{1,0:T(1,128)}', space=vmem, size = 0x12000, scoped, tag = 'internal scratch']
  %s0 = inlined_call_operand.vmem [shape: bf16[16,96], index: 0, kind: input, shape index: {}]
  %s1 = inlined_call_operand.vmem [shape: f32[2,1,8], index: 1, kind: input, shape index: {}]
  %s2 = inlined_call_operand.vmem [shape: bf16[16,32], index: 2, kind: output, shape index: {0}]
  %s3 = inlined_call_operand.vmem [shape: bf16[2,4,8,8], index: 3, kind: output, shape index: {1}]
  %4 = xla_tuple %s2, %s3
  %s5 = sld [smem:[#allocation0]]
  $region49: #{bert_pretrain_forward.16} parent=0
    _
  %s7 = ssub.s32 1, %s5
  %s8 = scalar_select 0, %s7, %s5
  loop: start=0, step=1, limit=4
  $region2: #{bert_pretrain_forward.16} parent=0 // loop_pre_header
    _
  $region3: #{bert_pretrain_forward.16} parent=0 // loop_header
    %s10 = sphi 0, %s14
    %p11 = scmp.ge.s32.totalorder %s10, 4
    %s17 = sphi 0, %s29
    %s18 = sphi 0, %s25
    %s19 = sphi 0, %s17
    %s20 = sphi 0, %s18
    %s21 = sphi 0, %s19
    %s22 = sphi 0, %s20
    %s34 = sphi 0, %s36
    %s37 = sphi 0, %s34
    %s38 = sphi 0, %s37
    %s54 = sphi 0, %s38
    %s60 = sphi 0, %s62
    %s63 = sphi 0, %s60
    %s64 = sphi 0, %s63
    %s80 = sphi 0, %s64
    %s88 = sphi 0, %s90
    %s91 = sphi 0, %s88
    %s92 = sphi 0, %s91
    %s108 = sphi 0, %s92
    %s116 = sphi 0, %s118
    %s119 = sphi 0, %s116
    %s120 = sphi 0, %s119
    %s136 = sphi 0, %s120
  $region4: #{bert_pretrain_forward.16} parent=0 // loop_header_branch
    %13 = sbr.rel (%p11) target = $region8
  $region5: #{bert_pretrain_forward.16} parent=0 // loop_body
    %s15 = ssub.s32 %s10, 1
    %s16 = ssub.s32 %s10, 2
    %s23 = sadd.s32 1, %s18
    %p24 = scmp.ge.s32.totalorder %s23, 1
    %s25 = scalar_select %p24, 0, %s23
    %s26 = sadd.s32 1, %s17
    %s27 = scalar_select %p24, %s26, %s17
    %p28 = scmp.ge.s32.totalorder %s27, 2
    %s29 = scalar_select %p28, 0, %s27
    %s30 = ssub.s32 %s17, %s29
    %s31 = ssub.s32 %s18, %s25
    %s32 = sor.u32 %s30, %s31
    %p33 = scmp.eq.s32.totalorder %s32, 0
    %s35 = sadd.s32 %s34, 1
    %s36 = scalar_select %p33, %s34, %s35
    %p39 = pneg %p33
    %p40 = scmp.eq.s32.totalorder %s10, 1
    %p41 = por %p39, %p40
    %p42 = scmp.ne.s32.totalorder %s34, %s37
    %p43 = scmp.eq.s32.totalorder %s10, 0
    %p44 = por %p42, %p43
    %p45 = scmp.ne.s32.totalorder %s34, %s37
    %p46 = scmp.eq.s32.totalorder %s15, 1
    %p47 = por %p45, %p46
    %p48 = scmp.ne.s32.totalorder %s37, %s38
    %p49 = scmp.eq.s32.totalorder %s15, 0
    %p50 = por %p48, %p49
    %p51 = scmp.ne.s32.totalorder %s37, %s38
    %p52 = scmp.eq.s32.totalorder %s16, 1
    %p53 = por %p51, %p52
    %p55 = scmp.ne.s32.totalorder %s38, %s54
    %p56 = scmp.eq.s32.totalorder %s16, 0
    %p57 = por %p55, %p56
    %s58 = ssub.s32 %s17, %s29
    %p59 = scmp.eq.s32.totalorder %s58, 0
    %s61 = sadd.s32 %s60, 1
    %s62 = scalar_select %p59, %s60, %s61
    %p65 = pneg %p59
    %p66 = scmp.eq.s32.totalorder %s10, 1
    %p67 = por %p65, %p66
    %p68 = scmp.ne.s32.totalorder %s60, %s63
    %p69 = scmp.eq.s32.totalorder %s10, 0
    %p70 = por %p68, %p69
    %p71 = scmp.ne.s32.totalorder %s60, %s63
    %p72 = scmp.eq.s32.totalorder %s15, 1
    %p73 = por %p71, %p72
    %p74 = scmp.ne.s32.totalorder %s63, %s64
    %p75 = scmp.eq.s32.totalorder %s15, 0
    %p76 = por %p74, %p75
    %p77 = scmp.ne.s32.totalorder %s63, %s64
    %p78 = scmp.eq.s32.totalorder %s16, 1
    %p79 = por %p77, %p78
    %p81 = scmp.ne.s32.totalorder %s64, %s80
    %p82 = scmp.eq.s32.totalorder %s16, 0
    %p83 = por %p81, %p82
    %s84 = ssub.s32 %s17, %s29
    %s85 = ssub.s32 %s18, %s25
    %s86 = sor.u32 %s84, %s85
    %p87 = scmp.eq.s32.totalorder %s86, 0
    %s89 = sadd.s32 %s88, 1
    %s90 = scalar_select %p87, %s88, %s89
    %p93 = pneg %p87
    %p94 = scmp.eq.s32.totalorder %s10, 1
    %p95 = por %p93, %p94
    %p96 = scmp.ne.s32.totalorder %s88, %s91
    %p97 = scmp.eq.s32.totalorder %s10, 0
    %p98 = por %p96, %p97
    %p99 = scmp.ne.s32.totalorder %s88, %s91
    %p100 = scmp.eq.s32.totalorder %s15, 1
    %p101 = por %p99, %p100
    %p102 = scmp.ne.s32.totalorder %s91, %s92
    %p103 = scmp.eq.s32.totalorder %s15, 0
    %p104 = por %p102, %p103
    %p105 = scmp.ne.s32.totalorder %s91, %s92
    %p106 = scmp.eq.s32.totalorder %s16, 1
    %p107 = por %p105, %p106
    %p109 = scmp.ne.s32.totalorder %s92, %s108
    %p110 = scmp.eq.s32.totalorder %s16, 0
    %p111 = por %p109, %p110
    %s112 = ssub.s32 %s17, %s29
    %s113 = ssub.s32 %s18, %s25
    %s114 = sor.u32 %s112, %s113
    %p115 = scmp.eq.s32.totalorder %s114, 0
    %s117 = sadd.s32 %s116, 1
    %s118 = scalar_select %p115, %s116, %s117
    %p121 = pneg %p115
    %p122 = scmp.eq.s32.totalorder %s10, 1
    %p123 = por %p121, %p122
    %p124 = scmp.ne.s32.totalorder %s116, %s119
    %p125 = scmp.eq.s32.totalorder %s10, 0
    %p126 = por %p124, %p125
    %p127 = scmp.ne.s32.totalorder %s116, %s119
    %p128 = scmp.eq.s32.totalorder %s15, 1
    %p129 = por %p127, %p128
    %p130 = scmp.ne.s32.totalorder %s119, %s120
    %p131 = scmp.eq.s32.totalorder %s15, 0
    %p132 = por %p130, %p131
    %p133 = scmp.ne.s32.totalorder %s119, %s120
    %p134 = scmp.eq.s32.totalorder %s16, 1
    %p135 = por %p133, %p134
    %p137 = scmp.ne.s32.totalorder %s120, %s136
    %p138 = scmp.eq.s32.totalorder %s16, 0
    %p139 = por %p137, %p138
    %p140 = scmp.le.s32.totalorder 1, %s10
    %p141 = scmp.lt.s32.totalorder %s10, 3
    %p142 = pnand %p140, %p141
    %p143 = pneg %p142
    // Predicated region
    $region9: #{bert_pretrain_forward.16} parent=5 // pred_check
      _
    $region10: #{bert_pretrain_forward.16} parent=5 // pred_check_branch
      %145 = sbr.rel (%p142) target = $region12
    $region11: #{bert_pretrain_forward.16} parent=5 // pred_region
      %s146 = ssub.s32 %s10, 1
    $region12: #{bert_pretrain_forward.16} parent=5 // pred_fallthru
      _
    %p147 = scmp.lt.s32.totalorder %s10, 2
    // Predicated region
    $region13: #{bert_pretrain_forward.16} parent=5 // pred_check
      %p148 = pneg %p147
    $region14: #{bert_pretrain_forward.16} parent=5 // pred_check_branch
      %150 = sbr.rel (%p148) target = $region16
    $region15: #{bert_pretrain_forward.16} parent=5 // pred_region
      // Predicated region
      $region17: #{bert_pretrain_forward.16} parent=15 // pred_check
        %p151 = pneg %p44
      $region18: #{bert_pretrain_forward.16} parent=15 // pred_check_branch
        %153 = sbr.rel (%p151) target = $region20
      $region19: #{bert_pretrain_forward.16} parent=15 // pred_region
        %p154 = scmp.lt.s32.totalorder %s17, 1
        %s155 = scalar_select %p154, %s17, 1
        %p156 = scmp.lt.s32.totalorder %s18, 0
        %s157 = scalar_select %p156, %s18, 0
        %s158 = sadd.s32 %s157, %s155
        %s159 = smul.addr %s158, 4
        %s160 = scalar_lea.vmem %s0, %s159
      $region20: #{bert_pretrain_forward.16} parent=15 // pred_fallthru
        _
      // Predicated region
      $region21: #{bert_pretrain_forward.16} parent=15 // pred_check
        %p161 = pneg %p70
      $region22: #{bert_pretrain_forward.16} parent=15 // pred_check_branch
        %163 = sbr.rel (%p161) target = $region24
      $region23: #{bert_pretrain_forward.16} parent=15 // pred_region
        %p164 = scmp.lt.s32.totalorder %s17, 1
        %s165 = scalar_select %p164, %s17, 1
        %s166 = scalar_lea.vmem %s1, %s165
      $region24: #{bert_pretrain_forward.16} parent=15 // pred_fallthru
        _
    $region16: #{bert_pretrain_forward.16} parent=5 // pred_fallthru
      _
    %p167 = scmp.le.s32.totalorder 1, %s10
    %p168 = scmp.lt.s32.totalorder %s10, 3
    %p169 = pnand %p167, %p168
    %p170 = pneg %p169
    // Predicated region
    $region25: #{bert_pretrain_forward.16} parent=5 // pred_check
      _
    $region26: #{bert_pretrain_forward.16} parent=5 // pred_check_branch
      %172 = sbr.rel (%p169) target = $region28
    $region27: #{bert_pretrain_forward.16} parent=5 // pred_region
      %s173 = ssub.s32 %s10, 1
      %p174 = scmp.lt.s32.totalorder %s19, 1
      %s175 = scalar_select %p174, %s19, 1
      %p176 = scmp.lt.s32.totalorder %s20, 0
      %s177 = scalar_select %p176, %s20, 0
      %s178 = sadd.s32 %s177, %s175
      %s179 = smul.addr %s178, 4
      %s180 = scalar_lea.vmem %s0, %s179
      %p181 = pneg %p50
      %p182 = pneg %p47
      %p183 = scmp.lt.s32.totalorder %s19, 1
      %s184 = scalar_select %p183, %s19, 1
      %s185 = scalar_lea.vmem %s1, %s184
      %p186 = pneg %p76
      %p187 = pneg %p73
      %p188 = pneg %p104
      %p189 = pneg %p101
      %p190 = scmp.lt.s32.totalorder %s19, 1
      %s191 = scalar_select %p190, %s19, 1
      %p192 = scmp.lt.s32.totalorder %s20, 0
      %s193 = scalar_select %p192, %s20, 0
      %s194 = sadd.s32 %s193, %s191
      %s195 = smul.addr %s194, 4
      %s196 = scalar_lea.vmem %s2, %s195
      %p197 = pneg %p132
      %p198 = pneg %p129
      %s199 = smul.u32 4, %s20
      %p200 = scmp.lt.s32.totalorder %s19, 1
      %s201 = scalar_select %p200, %s19, 1
      %p202 = scmp.lt.s32.totalorder %s199, 3
      %s203 = scalar_select %p202, %s199, 3
      %s204 = smul.addr %s201, 4
      %s205 = sadd.s32 %s203, %s204
      %s206 = smul.addr %s205, 4
      %s207 = scalar_lea.vmem %s3, %s206
      %p208 = scmp.lt.s32.totalorder %s19, 1
      %s209 = scalar_select %p208, %s19, 1
      %p210 = scmp.lt.s32.totalorder %s20, 0
      %s211 = scalar_select %p210, %s20, 0
      %s212 = sadd.s32 %s211, %s209
      %s213 = smul.addr %s212, 4
      %s214 = scalar_lea.vmem %s0, %s213
      %p215 = scmp.lt.s32.totalorder %s19, 1
      %s216 = scalar_select %p215, %s19, 1
      %s217 = scalar_lea.vmem %s1, %s216
      %p218 = scmp.lt.s32.totalorder %s19, 1
      %s219 = scalar_select %p218, %s19, 1
      %p220 = scmp.lt.s32.totalorder %s20, 0
      %s221 = scalar_select %p220, %s20, 0
      %s222 = sadd.s32 %s221, %s219
      %s223 = smul.addr %s222, 4
      %s224 = scalar_lea.vmem %s2, %s223
      %s225 = smul.u32 4, %s20
      %p226 = scmp.lt.s32.totalorder %s19, 1
      %s227 = scalar_select %p226, %s19, 1
      %p228 = scmp.lt.s32.totalorder %s225, 3
      %s229 = scalar_select %p228, %s225, 3
      %s230 = smul.addr %s227, 4
      %s231 = sadd.s32 %s229, %s230
      %s232 = smul.addr %s231, 4
      %s233 = scalar_lea.vmem %s3, %s232
      %s234 = smul.u32 4, %s20
      %v236 = vld [vmem:[%s217] sm:$0x1]
      %v237 = vld [vmem:[%s214] sm:$0xf]
      %v239 = vlaneseq
      %v240 = vshrl.u32 %v239, 7
      %v241 = vsub.s32 0, %v240
      %v242 = vrot.slane %v236, %v241
      %v245 = vunpack.c.l.b16 %v237
      %v246 = vpack.c.b16 %v245, %v245
      %247 = vrot.lane.b32.xlu0 %v246, 120
      %v248 = vpop.permute.xlu0 %247
      %vm249 = vcmask 64512
      %v251 = vsel %vm249, %v237, 0
      %v254 = vsel %vm249, %v248, 0
      %256 = vmatprep.subr.bf16.mxu0 0
      %257 = vmatpush1.bf16.xpose.msra.mxu0 %v254
      %258 = vmatprep.subr.bf16.mxu0 0
      %259 = vmatpush1.bf16.xpose.msra.mxu0 0
      %260 = vmatprep.subr.bf16.mxu0 0
      %261 = vmatpush1.bf16.xpose.msra.mxu0 0
      %262 = vmatprep.subr.bf16.mxu0 0
      %263 = vmatpush1.bf16.xpose.msra.mxu0 0
      %264 = vmatprep.subr.bf16.mxu0 0
      %265 = vmatpush1.bf16.xpose.msra.mxu0 0
      %266 = vmatprep.subr.bf16.mxu0 0
      %267 = vmatpush1.bf16.xpose.msra.mxu0 0
      %268 = vmatprep.subr.bf16.mxu0 0
      %269 = vmatpush1.bf16.xpose.msra.mxu0 0
      %270 = vmatprep.subr.bf16.mxu0 0
      %271 = vmatpush1.bf16.xpose.msra.mxu0 0
      %272 = vmatprep.subr.bf16.mxu0 0
      %273 = vmatpush1.bf16.xpose.msra.mxu0 0
      %274 = vmatprep.subr.bf16.mxu0 0
      %275 = vmatpush1.bf16.xpose.msra.mxu0 0
      %276 = vmatprep.subr.bf16.mxu0 0
      %277 = vmatpush1.bf16.xpose.msra.mxu0 0
      %278 = vmatprep.subr.bf16.mxu0 0
      %279 = vmatpush1.bf16.xpose.msra.mxu0 0
      %280 = vmatprep.subr.bf16.mxu0 0
      %281 = vmatpush1.bf16.xpose.msra.mxu0 0
      %282 = vmatprep.subr.bf16.mxu0 0
      %283 = vmatpush1.bf16.xpose.msra.mxu0 0
      %284 = vmatprep.subr.bf16.mxu0 0
      %285 = vmatpush1.bf16.xpose.msra.mxu0 0
      %286 = vmatprep.subr.bf16.mxu0 0
      %287 = vmatpush1.bf16.xpose.msra.mxu0 0
      %288 = vmatprep.mubr.bf16.mxu0 0
      %289 = vmatmul.mubr.bf16.gmra.mrb[0].mxu0 %v251
      %v290 = vpop.f32.mrb[0].mxu0
      %v291 = vadd.f32 %v242, %v290
      %v292 = vpop.f32.mrb[0].mxu0
      %v293 = vpop.f32.mrb[0].mxu0
      %v294 = vpop.f32.mrb[0].mxu0
      %295 = vdwg.mxu0
      %v296 = vsel %vm249, %v291, -inf
      %297 = vmax.xlane.f32.xlu0 %v296
      %v298 = vpop.xlane.xlu0 %297
      %v299 = vsub.f32 %v291, %v298
      %v300 = vmul.f32 %v299, 1.442695
      %v301 = vpow.pop %v300
      %v302 = vsel %vm249, %v301, 0.0
      %303 = vadd.xlane.f32.xlu0 %v302
      %v304 = vpop.xlane.xlu0 %303
      %v305 = vrcp.pop %v304
      %v306 = vmul.f32 1.0, %v305
      %v307 = vmul.f32 %v301, %v306
      %v308 = vpack.c.bf16 %v307, %v307
      %vm309 = vcmask 60416
      %310 = vst.msk [vmem:[%s233] sm:$0xf] %vm309, %v308
      %311 = vrot.lane.b32.xlu0 %v246, 112
      %v312 = vpop.permute.xlu0 %311
      %v314 = vsel %vm249, %v308, 0
      %vm316 = vcmask 1043456
      %v318 = vsel %vm316, %v312, 0
      %320 = vmatprep.subr.bf16.mxu0 0
      %321 = vmatpush1.bf16.msra.mxu0 %v318
      %322 = vmatprep.subr.bf16.mxu0 0
      %323 = vmatpush1.bf16.msra.mxu0 0
      %324 = vmatprep.subr.bf16.mxu0 0
      %325 = vmatpush1.bf16.msra.mxu0 0
      %326 = vmatprep.subr.bf16.mxu0 0
      %327 = vmatpush1.bf16.msra.mxu0 0
      %328 = vmatprep.subr.bf16.mxu0 0
      %329 = vmatpush1.bf16.msra.mxu0 0
      %330 = vmatprep.subr.bf16.mxu0 0
      %331 = vmatpush1.bf16.msra.mxu0 0
      %332 = vmatprep.subr.bf16.mxu0 0
      %333 = vmatpush1.bf16.msra.mxu0 0
      %334 = vmatprep.subr.bf16.mxu0 0
      %335 = vmatpush1.bf16.msra.mxu0 0
      %336 = vmatprep.subr.bf16.mxu0 0
      %337 = vmatpush1.bf16.msra.mxu0 0
      %338 = vmatprep.subr.bf16.mxu0 0
      %339 = vmatpush1.bf16.msra.mxu0 0
      %340 = vmatprep.subr.bf16.mxu0 0
      %341 = vmatpush1.bf16.msra.mxu0 0
      %342 = vmatprep.subr.bf16.mxu0 0
      %343 = vmatpush1.bf16.msra.mxu0 0
      %344 = vmatprep.subr.bf16.mxu0 0
      %345 = vmatpush1.bf16.msra.mxu0 0
      %346 = vmatprep.subr.bf16.mxu0 0
      %347 = vmatpush1.bf16.msra.mxu0 0
      %348 = vmatprep.subr.bf16.mxu0 0
      %349 = vmatpush1.bf16.msra.mxu0 0
      %350 = vmatprep.subr.bf16.mxu0 0
      %351 = vmatpush1.bf16.msra.mxu0 0
      %352 = vmatprep.mubr.bf16.mxu0 0
      %353 = vmatmul.mubr.bf16.gmra.mrb[0].mxu0 %v314
      %v354 = vpop.f32.mrb[0].mxu0
      %v355 = vadd.f32 0.0, %v354
      %v356 = vpop.f32.mrb[0].mxu0
      %v357 = vpop.f32.mrb[0].mxu0
      %v358 = vpop.f32.mrb[0].mxu0
      %359 = vdwg.mxu0
      %v360 = vpack.c.bf16 %v355, %v355
      %361 = vst.msk [vmem:[%s224] sm:$0xf] %vm309, %v360
      %v362 = vld [vmem:[%s214] sm:$0xf]
      %v364 = vunpack.c.l.b16 %v362
      %v365 = vpack.c.b16 %v364, %v364
      %366 = vrot.lane.b32.xlu0 %v365, 104
      %v367 = vpop.permute.xlu0 %366
      %368 = vrot.lane.b32.xlu0 %v365, 96
      %v369 = vpop.permute.xlu0 %368
      %v371 = vsel %vm249, %v367, 0
      %v374 = vsel %vm249, %v369, 0
      %376 = vmatprep.subr.bf16.mxu0 0
      %377 = vmatpush1.bf16.xpose.msra.mxu0 %v374
      %378 = vmatprep.subr.bf16.mxu0 0
      %379 = vmatpush1.bf16.xpose.msra.mxu0 0
      %380 = vmatprep.subr.bf16.mxu0 0
      %381 = vmatpush1.bf16.xpose.msra.mxu0 0
      %382 = vmatprep.subr.bf16.mxu0 0
      %383 = vmatpush1.bf16.xpose.msra.mxu0 0
      %384 = vmatprep.subr.bf16.mxu0 0
      %385 = vmatpush1.bf16.xpose.msra.mxu0 0
      %386 = vmatprep.subr.bf16.mxu0 0
      %387 = vmatpush1.bf16.xpose.msra.mxu0 0
      %388 = vmatprep.subr.bf16.mxu0 0
      %389 = vmatpush1.bf16.xpose.msra.mxu0 0
      %390 = vmatprep.subr.bf16.mxu0 0
      %391 = vmatpush1.bf16.xpose.msra.mxu0 0
      %392 = vmatprep.subr.bf16.mxu0 0
      %393 = vmatpush1.bf16.xpose.msra.mxu0 0
      %394 = vmatprep.subr.bf16.mxu0 0
      %395 = vmatpush1.bf16.xpose.msra.mxu0 0
      %396 = vmatprep.subr.bf16.mxu0 0
      %397 = vmatpush1.bf16.xpose.msra.mxu0 0
      %398 = vmatprep.subr.bf16.mxu0 0
      %399 = vmatpush1.bf16.xpose.msra.mxu0 0
      %400 = vmatprep.subr.bf16.mxu0 0
      %401 = vmatpush1.bf16.xpose.msra.mxu0 0
      %402 = vmatprep.subr.bf16.mxu0 0
      %403 = vmatpush1.bf16.xpose.msra.mxu0 0
      %404 = vmatprep.subr.bf16.mxu0 0
      %405 = vmatpush1.bf16.xpose.msra.mxu0 0
      %406 = vmatprep.subr.bf16.mxu0 0
      %407 = vmatpush1.bf16.xpose.msra.mxu0 0
      %408 = vmatprep.mubr.bf16.mxu0 0
      %409 = vmatmul.mubr.bf16.gmra.mrb[0].mxu0 %v371
      %v410 = vpop.f32.mrb[0].mxu0
      %v411 = vadd.f32 %v242, %v410
      %v412 = vpop.f32.mrb[0].mxu0
      %v413 = vpop.f32.mrb[0].mxu0
      %v414 = vpop.f32.mrb[0].mxu0
      %415 = vdwg.mxu0
      %v416 = vsel %vm249, %v411, -inf
      %417 = vmax.xlane.f32.xlu0 %v416
      %v418 = vpop.xlane.xlu0 %417
      %v419 = vsub.f32 %v411, %v418
      %v420 = vmul.f32 %v419, 1.442695
      %v421 = vpow.pop %v420
      %v422 = vsel %vm249, %v421, 0.0
      %423 = vadd.xlane.f32.xlu0 %v422
      %v424 = vpop.xlane.xlu0 %423
      %v425 = vrcp.pop %v424
      %v426 = vmul.f32 1.0, %v425
      %v427 = vmul.f32 %v421, %v426
      %v428 = vpack.c.bf16 %v427, %v427
      %s429 = scalar_lea.vmem %s233, 4
      %430 = vst.msk [vmem:[%s429] sm:$0xf] %vm309, %v428
      %431 = vrot.lane.b32.xlu0 %v365, 88
      %v432 = vpop.permute.xlu0 %431
      %v434 = vsel %vm249, %v428, 0
      %v437 = vsel %vm316, %v432, 0
      %439 = vmatprep.subr.bf16.mxu0 0
      %440 = vmatpush1.bf16.msra.mxu0 %v437
      %441 = vmatprep.subr.bf16.mxu0 0
      %442 = vmatpush1.bf16.msra.mxu0 0
      %443 = vmatprep.subr.bf16.mxu0 0
      %444 = vmatpush1.bf16.msra.mxu0 0
      %445 = vmatprep.subr.bf16.mxu0 0
      %446 = vmatpush1.bf16.msra.mxu0 0
      %447 = vmatprep.subr.bf16.mxu0 0
      %448 = vmatpush1.bf16.msra.mxu0 0
      %449 = vmatprep.subr.bf16.mxu0 0
      %450 = vmatpush1.bf16.msra.mxu0 0
      %451 = vmatprep.subr.bf16.mxu0 0
      %452 = vmatpush1.bf16.msra.mxu0 0
      %453 = vmatprep.subr.bf16.mxu0 0
      %454 = vmatpush1.bf16.msra.mxu0 0
      %455 = vmatprep.subr.bf16.mxu0 0
      %456 = vmatpush1.bf16.msra.mxu0 0
      %457 = vmatprep.subr.bf16.mxu0 0
      %458 = vmatpush1.bf16.msra.mxu0 0
      %459 = vmatprep.subr.bf16.mxu0 0
      %460 = vmatpush1.bf16.msra.mxu0 0
      %461 = vmatprep.subr.bf16.mxu0 0
      %462 = vmatpush1.bf16.msra.mxu0 0
      %463 = vmatprep.subr.bf16.mxu0 0
      %464 = vmatpush1.bf16.msra.mxu0 0
      %465 = vmatprep.subr.bf16.mxu0 0
      %466 = vmatpush1.bf16.msra.mxu0 0
      %467 = vmatprep.subr.bf16.mxu0 0
      %468 = vmatpush1.bf16.msra.mxu0 0
      %469 = vmatprep.subr.bf16.mxu0 0
      %470 = vmatpush1.bf16.msra.mxu0 0
      %471 = vmatprep.mubr.bf16.mxu0 0
      %472 = vmatmul.mubr.bf16.gmra.mrb[0].mxu0 %v434
      %v473 = vpop.f32.mrb[0].mxu0
      %v474 = vadd.f32 0.0, %v473
      %v475 = vpop.f32.mrb[0].mxu0
      %v476 = vpop.f32.mrb[0].mxu0
      %v477 = vpop.f32.mrb[0].mxu0
      %478 = vdwg.mxu0
      %v479 = vpack.c.bf16 %v474, %v474
      %v481 = vunpack.c.l.b16 %v479
      %v482 = vpack.c.b16 %v481, %v481
      %483 = vrot.lane.b32.xlu0 %v482, 8
      %v484 = vpop.permute.xlu0 %483
      %vm486 = vcmask 126016
      %487 = vst.msk [vmem:[%s224] sm:$0xf] %vm486, %v484
      %v488 = vld [vmem:[%s214] sm:$0xf]
      %v490 = vunpack.c.l.b16 %v488
      %v491 = vpack.c.b16 %v490, %v490
      %492 = vrot.lane.b32.xlu0 %v491, 80
      %v493 = vpop.permute.xlu0 %492
      %494 = vrot.lane.b32.xlu0 %v491, 72
      %v495 = vpop.permute.xlu0 %494
      %v497 = vsel %vm249, %v493, 0
      %v500 = vsel %vm249, %v495, 0
      %502 = vmatprep.subr.bf16.mxu0 0
      %503 = vmatpush1.bf16.xpose.msra.mxu0 %v500
      %504 = vmatprep.subr.bf16.mxu0 0
      %505 = vmatpush1.bf16.xpose.msra.mxu0 0
      %506 = vmatprep.subr.bf16.mxu0 0
      %507 = vmatpush1.bf16.xpose.msra.mxu0 0
      %508 = vmatprep.subr.bf16.mxu0 0
      %509 = vmatpush1.bf16.xpose.msra.mxu0 0
      %510 = vmatprep.subr.bf16.mxu0 0
      %511 = vmatpush1.bf16.xpose.msra.mxu0 0
      %512 = vmatprep.subr.bf16.mxu0 0
      %513 = vmatpush1.bf16.xpose.msra.mxu0 0
      %514 = vmatprep.subr.bf16.mxu0 0
      %515 = vmatpush1.bf16.xpose.msra.mxu0 0
      %516 = vmatprep.subr.bf16.mxu0 0
      %517 = vmatpush1.bf16.xpose.msra.mxu0 0
      %518 = vmatprep.subr.bf16.mxu0 0
      %519 = vmatpush1.bf16.xpose.msra.mxu0 0
      %520 = vmatprep.subr.bf16.mxu0 0
      %521 = vmatpush1.bf16.xpose.msra.mxu0 0
      %522 = vmatprep.subr.bf16.mxu0 0
      %523 = vmatpush1.bf16.xpose.msra.mxu0 0
      %524 = vmatprep.subr.bf16.mxu0 0
      %525 = vmatpush1.bf16.xpose.msra.mxu0 0
      %526 = vmatprep.subr.bf16.mxu0 0
      %527 = vmatpush1.bf16.xpose.msra.mxu0 0
      %528 = vmatprep.subr.bf16.mxu0 0
      %529 = vmatpush1.bf16.xpose.msra.mxu0 0
      %530 = vmatprep.subr.bf16.mxu0 0
      %531 = vmatpush1.bf16.xpose.msra.mxu0 0
      %532 = vmatprep.subr.bf16.mxu0 0
      %533 = vmatpush1.bf16.xpose.msra.mxu0 0
      %534 = vmatprep.mubr.bf16.mxu0 0
      %535 = vmatmul.mubr.bf16.gmra.mrb[0].mxu0 %v497
      %v536 = vpop.f32.mrb[0].mxu0
      %v537 = vadd.f32 %v242, %v536
      %v538 = vpop.f32.mrb[0].mxu0
      %v539 = vpop.f32.mrb[0].mxu0
      %v540 = vpop.f32.mrb[0].mxu0
      %541 = vdwg.mxu0
      %v542 = vsel %vm249, %v537, -inf
      %543 = vmax.xlane.f32.xlu0 %v542
      %v544 = vpop.xlane.xlu0 %543
      %v545 = vsub.f32 %v537, %v544
      %v546 = vmul.f32 %v545, 1.442695
      %v547 = vpow.pop %v546
      %v548 = vsel %vm249, %v547, 0.0
      %549 = vadd.xlane.f32.xlu0 %v548
      %v550 = vpop.xlane.xlu0 %549
      %v551 = vrcp.pop %v550
      %v552 = vmul.f32 1.0, %v551
      %v553 = vmul.f32 %v547, %v552
      %v554 = vpack.c.bf16 %v553, %v553
      %s555 = scalar_lea.vmem %s233, 8
      %556 = vst.msk [vmem:[%s555] sm:$0xf] %vm309, %v554
      %557 = vrot.lane.b32.xlu0 %v491, 64
      %v558 = vpop.permute.xlu0 %557
      %v560 = vsel %vm249, %v554, 0
      %v563 = vsel %vm316, %v558, 0
      %565 = vmatprep.subr.bf16.mxu0 0
      %566 = vmatpush1.bf16.msra.mxu0 %v563
      %567 = vmatprep.subr.bf16.mxu0 0
      %568 = vmatpush1.bf16.msra.mxu0 0
      %569 = vmatprep.subr.bf16.mxu0 0
      %570 = vmatpush1.bf16.msra.mxu0 0
      %571 = vmatprep.subr.bf16.mxu0 0
      %572 = vmatpush1.bf16.msra.mxu0 0
      %573 = vmatprep.subr.bf16.mxu0 0
      %574 = vmatpush1.bf16.msra.mxu0 0
      %575 = vmatprep.subr.bf16.mxu0 0
      %576 = vmatpush1.bf16.msra.mxu0 0
      %577 = vmatprep.subr.bf16.mxu0 0
      %578 = vmatpush1.bf16.msra.mxu0 0
      %579 = vmatprep.subr.bf16.mxu0 0
      %580 = vmatpush1.bf16.msra.mxu0 0
      %581 = vmatprep.subr.bf16.mxu0 0
      %582 = vmatpush1.bf16.msra.mxu0 0
      %583 = vmatprep.subr.bf16.mxu0 0
      %584 = vmatpush1.bf16.msra.mxu0 0
      %585 = vmatprep.subr.bf16.mxu0 0
      %586 = vmatpush1.bf16.msra.mxu0 0
      %587 = vmatprep.subr.bf16.mxu0 0
      %588 = vmatpush1.bf16.msra.mxu0 0
      %589 = vmatprep.subr.bf16.mxu0 0
      %590 = vmatpush1.bf16.msra.mxu0 0
      %591 = vmatprep.subr.bf16.mxu0 0
      %592 = vmatpush1.bf16.msra.mxu0 0
      %593 = vmatprep.subr.bf16.mxu0 0
      %594 = vmatpush1.bf16.msra.mxu0 0
      %595 = vmatprep.subr.bf16.mxu0 0
      %596 = vmatpush1.bf16.msra.mxu0 0
      %597 = vmatprep.mubr.bf16.mxu0 0
      %598 = vmatmul.mubr.bf16.gmra.mrb[0].mxu0 %v560
      %v599 = vpop.f32.mrb[0].mxu0
      %v600 = vadd.f32 0.0, %v599
      %v601 = vpop.f32.mrb[0].mxu0
      %v602 = vpop.f32.mrb[0].mxu0
      %v603 = vpop.f32.mrb[0].mxu0
      %604 = vdwg.mxu0
      %v605 = vpack.c.bf16 %v600, %v600
      %v607 = vunpack.c.l.b16 %v605
      %v608 = vpack.c.b16 %v607, %v607
      %609 = vrot.lane.b32.xlu0 %v608, 16
      %v610 = vpop.permute.xlu0 %609
      %vm612 = vcmask 191616
      %613 = vst.msk [vmem:[%s224] sm:$0xf] %vm612, %v610
      %v614 = vld [vmem:[%s214] sm:$0xf]
      %v616 = vunpack.c.l.b16 %v614
      %v617 = vpack.c.b16 %v616, %v616
      %618 = vrot.lane.b32.xlu0 %v617, 56
      %v619 = vpop.permute.xlu0 %618
      %620 = vrot.lane.b32.xlu0 %v617, 48
      %v621 = vpop.permute.xlu0 %620
      %v623 = vsel %vm249, %v619, 0
      %v626 = vsel %vm249, %v621, 0
      %628 = vmatprep.subr.bf16.mxu0 0
      %629 = vmatpush1.bf16.xpose.msra.mxu0 %v626
      %630 = vmatprep.subr.bf16.mxu0 0
      %631 = vmatpush1.bf16.xpose.msra.mxu0 0
      %632 = vmatprep.subr.bf16.mxu0 0
      %633 = vmatpush1.bf16.xpose.msra.mxu0 0
      %634 = vmatprep.subr.bf16.mxu0 0
      %635 = vmatpush1.bf16.xpose.msra.mxu0 0
      %636 = vmatprep.subr.bf16.mxu0 0
      %637 = vmatpush1.bf16.xpose.msra.mxu0 0
      %638 = vmatprep.subr.bf16.mxu0 0
      %639 = vmatpush1.bf16.xpose.msra.mxu0 0
      %640 = vmatprep.subr.bf16.mxu0 0
      %641 = vmatpush1.bf16.xpose.msra.mxu0 0
      %642 = vmatprep.subr.bf16.mxu0 0
      %643 = vmatpush1.bf16.xpose.msra.mxu0 0
      %644 = vmatprep.subr.bf16.mxu0 0
      %645 = vmatpush1.bf16.xpose.msra.mxu0 0
      %646 = vmatprep.subr.bf16.mxu0 0
      %647 = vmatpush1.bf16.xpose.msra.mxu0 0
      %648 = vmatprep.subr.bf16.mxu0 0
      %649 = vmatpush1.bf16.xpose.msra.mxu0 0
      %650 = vmatprep.subr.bf16.mxu0 0
      %651 = vmatpush1.bf16.xpose.msra.mxu0 0
      %652 = vmatprep.subr.bf16.mxu0 0
      %653 = vmatpush1.bf16.xpose.msra.mxu0 0
      %654 = vmatprep.subr.bf16.mxu0 0
      %655 = vmatpush1.bf16.xpose.msra.mxu0 0
      %656 = vmatprep.subr.bf16.mxu0 0
      %657 = vmatpush1.bf16.xpose.msra.mxu0 0
      %658 = vmatprep.subr.bf16.mxu0 0
      %659 = vmatpush1.bf16.xpose.msra.mxu0 0
      %660 = vmatprep.mubr.bf16.mxu0 0
      %661 = vmatmul.mubr.bf16.gmra.mrb[0].mxu0 %v623
      %v662 = vpop.f32.mrb[0].mxu0
      %v663 = vadd.f32 %v242, %v662
      %v664 = vpop.f32.mrb[0].mxu0
      %v665 = vpop.f32.mrb[0].mxu0
      %v666 = vpop.f32.mrb[0].mxu0
      %667 = vdwg.mxu0
      %v668 = vsel %vm249, %v663, -inf
      %669 = vmax.xlane.f32.xlu0 %v668
      %v670 = vpop.xlane.xlu0 %669
      %v671 = vsub.f32 %v663, %v670
      %v672 = vmul.f32 %v671, 1.442695
      %v673 = vpow.pop %v672
      %v674 = vsel %vm249, %v673, 0.0
      %675 = vadd.xlane.f32.xlu0 %v674
      %v676 = vpop.xlane.xlu0 %675
      %v677 = vrcp.pop %v676
      %v678 = vmul.f32 1.0, %v677
      %v679 = vmul.f32 %v673, %v678
      %v680 = vpack.c.bf16 %v679, %v679
      %s681 = scalar_lea.vmem %s233, 12
      %682 = vst.msk [vmem:[%s681] sm:$0xf] %vm309, %v680
      %683 = vrot.lane.b32.xlu0 %v617, 40
      %v684 = vpop.permute.xlu0 %683
      %v686 = vsel %vm249, %v680, 0
      %v689 = vsel %vm316, %v684, 0
      %691 = vmatprep.subr.bf16.mxu0 0
      %692 = vmatpush1.bf16.msra.mxu0 %v689
      %693 = vmatprep.subr.bf16.mxu0 0
      %694 = vmatpush1.bf16.msra.mxu0 0
      %695 = vmatprep.subr.bf16.mxu0 0
      %696 = vmatpush1.bf16.msra.mxu0 0
      %697 = vmatprep.subr.bf16.mxu0 0
      %698 = vmatpush1.bf16.msra.mxu0 0
      %699 = vmatprep.subr.bf16.mxu0 0
      %700 = vmatpush1.bf16.msra.mxu0 0
      %701 = vmatprep.subr.bf16.mxu0 0
      %702 = vmatpush1.bf16.msra.mxu0 0
      %703 = vmatprep.subr.bf16.mxu0 0
      %704 = vmatpush1.bf16.msra.mxu0 0
      %705 = vmatprep.subr.bf16.mxu0 0
      %706 = vmatpush1.bf16.msra.mxu0 0
      %707 = vmatprep.subr.bf16.mxu0 0
      %708 = vmatpush1.bf16.msra.mxu0 0
      %709 = vmatprep.subr.bf16.mxu0 0
      %710 = vmatpush1.bf16.msra.mxu0 0
      %711 = vmatprep.subr.bf16.mxu0 0
      %712 = vmatpush1.bf16.msra.mxu0 0
      %713 = vmatprep.subr.bf16.mxu0 0
      %714 = vmatpush1.bf16.msra.mxu0 0
      %715 = vmatprep.subr.bf16.mxu0 0
      %716 = vmatpush1.bf16.msra.mxu0 0
      %717 = vmatprep.subr.bf16.mxu0 0
      %718 = vmatpush1.bf16.msra.mxu0 0
      %719 = vmatprep.subr.bf16.mxu0 0
      %720 = vmatpush1.bf16.msra.mxu0 0
      %721 = vmatprep.subr.bf16.mxu0 0
      %722 = vmatpush1.bf16.msra.mxu0 0
      %723 = vmatprep.mubr.bf16.mxu0 0
      %724 = vmatmul.mubr.bf16.gmra.mrb[0].mxu0 %v686
      %v725 = vpop.f32.mrb[0].mxu0
      %v726 = vadd.f32 0.0, %v725
      %v727 = vpop.f32.mrb[0].mxu0
      %v728 = vpop.f32.mrb[0].mxu0
      %v729 = vpop.f32.mrb[0].mxu0
      %730 = vdwg.mxu0
      %v731 = vpack.c.bf16 %v726, %v726
      %v733 = vunpack.c.l.b16 %v731
      %v734 = vpack.c.b16 %v733, %v733
      %735 = vrot.lane.b32.xlu0 %v734, 24
      %v736 = vpop.permute.xlu0 %735
      %vm738 = vcmask 257216
      %739 = vst.msk [vmem:[%s224] sm:$0xf] %vm738, %v736
      %p740 = scmp.lt.s32.totalorder %s19, 1
      %s741 = scalar_select %p740, %s19, 1
      %p742 = scmp.lt.s32.totalorder %s20, 0
      %s743 = scalar_select %p742, %s20, 0
      %s744 = sadd.s32 %s743, %s741
      %s745 = smul.addr %s744, 4
      %s746 = scalar_lea.vmem %s2, %s745
      %s747 = smul.u32 4, %s20
      %p748 = scmp.lt.s32.totalorder %s19, 1
      %s749 = scalar_select %p748, %s19, 1
      %p750 = scmp.lt.s32.totalorder %s747, 3
      %s751 = scalar_select %p750, %s747, 3
      %s752 = smul.addr %s749, 4
      %s753 = sadd.s32 %s751, %s752
      %s754 = smul.addr %s753, 4
      %s755 = scalar_lea.vmem %s3, %s754
      // Predicated region
      $region29: #{bert_pretrain_forward.16} parent=27 // pred_check
        %p756 = pneg %p101
      $region30: #{bert_pretrain_forward.16} parent=27 // pred_check_branch
        %758 = sbr.rel (%p756) target = $region32
      $region31: #{bert_pretrain_forward.16} parent=27 // pred_region
        _
      $region32: #{bert_pretrain_forward.16} parent=27 // pred_fallthru
        _
      // Predicated region
      $region33: #{bert_pretrain_forward.16} parent=27 // pred_check
        %p759 = pneg %p129
      $region34: #{bert_pretrain_forward.16} parent=27 // pred_check_branch
        %761 = sbr.rel (%p759) target = $region36
      $region35: #{bert_pretrain_forward.16} parent=27 // pred_region
        %s762 = smul.u32 4, %s20
      $region36: #{bert_pretrain_forward.16} parent=27 // pred_fallthru
        _
    $region28: #{bert_pretrain_forward.16} parent=5 // pred_fallthru
      _
    %p763 = scmp.le.s32.totalorder 2, %s10
    // Predicated region
    $region37: #{bert_pretrain_forward.16} parent=5 // pred_check
      %p764 = pneg %p763
    $region38: #{bert_pretrain_forward.16} parent=5 // pred_check_branch
      %766 = sbr.rel (%p764) target = $region40
    $region39: #{bert_pretrain_forward.16} parent=5 // pred_region
      %s767 = ssub.s32 %s10, 2
      // Predicated region
      $region41: #{bert_pretrain_forward.16} parent=39 // pred_check
        %p768 = pneg %p107
      $region42: #{bert_pretrain_forward.16} parent=39 // pred_check_branch
        %770 = sbr.rel (%p768) target = $region44
      $region43: #{bert_pretrain_forward.16} parent=39 // pred_region
        %p771 = scmp.lt.s32.totalorder %s21, 1
        %s772 = scalar_select %p771, %s21, 1
        %p773 = scmp.lt.s32.totalorder %s22, 0
        %s774 = scalar_select %p773, %s22, 0
        %s775 = sadd.s32 %s774, %s772
        %s776 = smul.addr %s775, 4
        %s777 = scalar_lea.vmem %s2, %s776
      $region44: #{bert_pretrain_forward.16} parent=39 // pred_fallthru
        _
      // Predicated region
      $region45: #{bert_pretrain_forward.16} parent=39 // pred_check
        %p778 = pneg %p135
      $region46: #{bert_pretrain_forward.16} parent=39 // pred_check_branch
        %780 = sbr.rel (%p778) target = $region48
      $region47: #{bert_pretrain_forward.16} parent=39 // pred_region
        %s781 = smul.u32 4, %s22
        %p782 = scmp.lt.s32.totalorder %s21, 1
        %s783 = scalar_select %p782, %s21, 1
        %p784 = scmp.lt.s32.totalorder %s781, 3
        %s785 = scalar_select %p784, %s781, 3
        %s786 = smul.addr %s783, 4
        %s787 = sadd.s32 %s785, %s786
        %s788 = smul.addr %s787, 4
        %s789 = scalar_lea.vmem %s3, %s788
      $region48: #{bert_pretrain_forward.16} parent=39 // pred_fallthru
        _
    $region40: #{bert_pretrain_forward.16} parent=5 // pred_fallthru
      _
  $region6: #{bert_pretrain_forward.16} parent=0 // loop_footer
    %s14 = sadd.s32 1, %s10
  $region7: #{bert_pretrain_forward.16} parent=0 // loop_footer_branch
    %9 = sbr.rel target = $region3
  $region8: #{bert_pretrain_forward.16} parent=0 // loop_exit
    _

// kernel: bert_pretrain_forward.29
$region0: #{bert_pretrain_forward.29}
  #allocation0 [shape = 'u32[]', space=smem, size = 0x4, offset = 0x4, fixed_abs, tag = 'smem constant byte address 0x4 - core index']
  #allocation1 [shape = 'u32[144,128]{1,0:T(1,128)}', space=vmem, size = 0x12000, scoped, tag = 'internal scratch']
  #allocation2 [shape = 'f32[16,128]{1,0:T(8,128)}', space=vmem, size = 0x2000, scoped, tag = 'scratch operand']
  %s0 = inlined_call_operand.vmem [shape: bf16[16,32], index: 0, kind: input, shape index: {}]
  %s1 = inlined_call_operand.vmem [shape: bf16[128,32], index: 1, kind: input, shape index: {}]
  %s2 = inlined_call_operand.vmem [shape: f32[1,128], index: 2, kind: input, shape index: {}]
  %s3 = inlined_call_operand.hbm [shape: f32[16,128], index: 3, kind: output, shape index: {}]
  %s4 = sld [smem:[#allocation0]]
  $region30: #{bert_pretrain_forward.29} parent=0
    _
  %s6 = ssub.s32 1, %s4
  %s7 = scalar_select 0, %s6, %s4
  $region1: #{bert_pretrain_forward.29} parent=0
    #allocation3 [shape = 'u8[8192]{0}', space=vmem, size = 0x2000, scoped, tag = 'output window, operand 0, single buffered']
    #allocation4 [shape = 's32[1]{0}', space=sflag, size = 0x4, scoped, tag = 'scoped memory for bert_pretrain_forward.29']
    %8 = vsyncpa [#allocation4], 0
    // Predicated region
    $region2: #{bert_pretrain_forward.29} parent=1 // pred_check
      _
    $region3: #{bert_pretrain_forward.29} parent=1 // pred_check_branch
      %10 = sbr.rel (0) target = $region5
    $region4: #{bert_pretrain_forward.29} parent=1 // pred_region
      _
    $region5: #{bert_pretrain_forward.29} parent=1 // pred_fallthru
      _
    // Predicated region
    $region6: #{bert_pretrain_forward.29} parent=1 // pred_check
      _
    $region7: #{bert_pretrain_forward.29} parent=1 // pred_check_branch
      %12 = sbr.rel (0) target = $region9
    $region8: #{bert_pretrain_forward.29} parent=1 // pred_region
      _
    $region9: #{bert_pretrain_forward.29} parent=1 // pred_fallthru
      _
    // Predicated region
    $region10: #{bert_pretrain_forward.29} parent=1 // pred_check
      _
    $region11: #{bert_pretrain_forward.29} parent=1 // pred_check_branch
      %14 = sbr.rel (0) target = $region13
    $region12: #{bert_pretrain_forward.29} parent=1 // pred_region
      _
    $region13: #{bert_pretrain_forward.29} parent=1 // pred_fallthru
      _
    %p16 = scmp.eq.s32.totalorder 0, 0
    // Predicated region
    $region14: #{bert_pretrain_forward.29} parent=1 // pred_check
      %p17 = pneg %p16
    $region15: #{bert_pretrain_forward.29} parent=1 // pred_check_branch
      %19 = sbr.rel (%p17) target = $region17
    $region16: #{bert_pretrain_forward.29} parent=1 // pred_region
      %20 = vst [vmem:[#allocation2] sm:$0xff] 0.0
      %21 = vst [vmem:[#allocation2 + $0x8] sm:$0xff] 0.0
    $region17: #{bert_pretrain_forward.29} parent=1 // pred_fallthru
      _
    %v22 = vld [vmem:[#allocation2] sm:$0xff]
    %v23 = vld [vmem:[#allocation2 + $0x8] sm:$0xff]
    %v24 = vld [vmem:[%s0] sm:$0xf]
    %v25 = vld [vmem:[%s0 + $0x4] sm:$0xf]
    %v26 = vld [vmem:[%s1] sm:$0xf]
    %v27 = vld [vmem:[%s1 + $0x4] sm:$0xf]
    %v28 = vld [vmem:[%s1 + $0x8] sm:$0xf]
    %v29 = vld [vmem:[%s1 + $0xc] sm:$0xf]
    %v30 = vld [vmem:[%s1 + $0x10] sm:$0xf]
    %v31 = vld [vmem:[%s1 + $0x14] sm:$0xf]
    %v32 = vld [vmem:[%s1 + $0x18] sm:$0xf]
    %v33 = vld [vmem:[%s1 + $0x1c] sm:$0xf]
    %v34 = vld [vmem:[%s1 + $0x20] sm:$0xf]
    %v35 = vld [vmem:[%s1 + $0x24] sm:$0xf]
    %v36 = vld [vmem:[%s1 + $0x28] sm:$0xf]
    %v37 = vld [vmem:[%s1 + $0x2c] sm:$0xf]
    %v38 = vld [vmem:[%s1 + $0x30] sm:$0xf]
    %v39 = vld [vmem:[%s1 + $0x34] sm:$0xf]
    %v40 = vld [vmem:[%s1 + $0x38] sm:$0xf]
    %v41 = vld [vmem:[%s1 + $0x3c] sm:$0xf]
    %v44 = vunpack.c.l.b16 %v24
    %v45 = vunpack.c.l.b16 %v25
    %v46 = vpack.c.b16 %v45, %v44
    %v63 = vunpack.c.l.b16 %v26
    %v64 = vunpack.c.l.b16 %v27
    %v65 = vunpack.c.l.b16 %v28
    %v66 = vunpack.c.l.b16 %v29
    %v67 = vunpack.c.l.b16 %v30
    %v68 = vunpack.c.l.b16 %v31
    %v69 = vunpack.c.l.b16 %v32
    %v70 = vunpack.c.l.b16 %v33
    %v71 = vunpack.c.l.b16 %v34
    %v72 = vunpack.c.l.b16 %v35
    %v73 = vunpack.c.l.b16 %v36
    %v74 = vunpack.c.l.b16 %v37
    %v75 = vunpack.c.l.b16 %v38
    %v76 = vunpack.c.l.b16 %v39
    %v77 = vunpack.c.l.b16 %v40
    %v78 = vunpack.c.l.b16 %v41
    %v79 = vpack.c.b16 %v64, %v63
    %v80 = vpack.c.b16 %v66, %v65
    %v81 = vpack.c.b16 %v68, %v67
    %v82 = vpack.c.b16 %v70, %v69
    %v83 = vpack.c.b16 %v72, %v71
    %v84 = vpack.c.b16 %v74, %v73
    %v85 = vpack.c.b16 %v76, %v75
    %v86 = vpack.c.b16 %v78, %v77
    %vm87 = vcmask 261120
    %v89 = vsel %vm87, %v46, 0
    %v92 = vsel %vm87, %v79, 0
    %v95 = vsel %vm87, %v80, 0
    %v98 = vsel %vm87, %v81, 0
    %v101 = vsel %vm87, %v82, 0
    %v104 = vsel %vm87, %v83, 0
    %v107 = vsel %vm87, %v84, 0
    %v110 = vsel %vm87, %v85, 0
    %v113 = vsel %vm87, %v86, 0
    %115 = vmatprep.subr.bf16.mxu0 0
    %116 = vmatpush1.bf16.xpose.msra.mxu0 %v92
    %117 = vmatprep.subr.bf16.mxu0 0
    %118 = vmatpush1.bf16.xpose.msra.mxu0 %v95
    %119 = vmatprep.subr.bf16.mxu0 0
    %120 = vmatpush1.bf16.xpose.msra.mxu0 %v98
    %121 = vmatprep.subr.bf16.mxu0 0
    %122 = vmatpush1.bf16.xpose.msra.mxu0 %v101
    %123 = vmatprep.subr.bf16.mxu0 0
    %124 = vmatpush1.bf16.xpose.msra.mxu0 %v104
    %125 = vmatprep.subr.bf16.mxu0 0
    %126 = vmatpush1.bf16.xpose.msra.mxu0 %v107
    %127 = vmatprep.subr.bf16.mxu0 0
    %128 = vmatpush1.bf16.xpose.msra.mxu0 %v110
    %129 = vmatprep.subr.bf16.mxu0 0
    %130 = vmatpush1.bf16.xpose.msra.mxu0 %v113
    %131 = vmatprep.subr.bf16.mxu0 0
    %132 = vmatpush1.bf16.xpose.msra.mxu0 0
    %133 = vmatprep.subr.bf16.mxu0 0
    %134 = vmatpush1.bf16.xpose.msra.mxu0 0
    %135 = vmatprep.subr.bf16.mxu0 0
    %136 = vmatpush1.bf16.xpose.msra.mxu0 0
    %137 = vmatprep.subr.bf16.mxu0 0
    %138 = vmatpush1.bf16.xpose.msra.mxu0 0
    %139 = vmatprep.subr.bf16.mxu0 0
    %140 = vmatpush1.bf16.xpose.msra.mxu0 0
    %141 = vmatprep.subr.bf16.mxu0 0
    %142 = vmatpush1.bf16.xpose.msra.mxu0 0
    %143 = vmatprep.subr.bf16.mxu0 0
    %144 = vmatpush1.bf16.xpose.msra.mxu0 0
    %145 = vmatprep.subr.bf16.mxu0 0
    %146 = vmatpush1.bf16.xpose.msra.mxu0 0
    %147 = vmatprep.mubr.bf16.mxu0 0
    %148 = vmatmul.mubr.bf16.gmra.mrb[0].mxu0 %v89
    %v149 = vpop.f32.mrb[0].mxu0
    %v150 = vadd.f32 0.0, %v149
    %v151 = vpop.f32.mrb[0].mxu0
    %v152 = vpop.f32.mrb[0].mxu0
    %v153 = vadd.f32 0.0, %v152
    %v154 = vpop.f32.mrb[0].mxu0
    %155 = vdwg.mxu0
    %v156 = vadd.f32 %v22, %v150
    %v157 = vadd.f32 %v23, %v153
    %158 = vst [vmem:[#allocation2] sm:$0xff] %v156
    %159 = vst [vmem:[#allocation2 + $0x8] sm:$0xff] %v157
    // Predicated region
    $region18: #{bert_pretrain_forward.29} parent=1 // pred_check
      %p160 = pneg %p16
    $region19: #{bert_pretrain_forward.29} parent=1 // pred_check_branch
      %162 = sbr.rel (%p160) target = $region21
    $region20: #{bert_pretrain_forward.29} parent=1 // pred_region
      %v163 = vld [vmem:[#allocation2] sm:$0xff]
      %v164 = vld [vmem:[#allocation2 + $0x8] sm:$0xff]
      %v165 = vld [vmem:[%s2] sm:$0x1]
      %v167 = vlaneseq
      %v168 = vshrl.u32 %v167, 7
      %v169 = vsub.s32 0, %v168
      %v170 = vrot.slane %v165, %v169
      %v172 = vadd.f32 %v163, %v170
      %v173 = vadd.f32 %v164, %v170
      %174 = vst [vmem:[#allocation3] sm:$0xff] %v172
      %175 = vst [vmem:[#allocation3 + $0x8] sm:$0xff] %v173
    $region21: #{bert_pretrain_forward.29} parent=1 // pred_fallthru
      _
    // Predicated region
    $region22: #{bert_pretrain_forward.29} parent=1 // pred_check
      _
    $region23: #{bert_pretrain_forward.29} parent=1 // pred_check_branch
      %177 = sbr.rel (0) target = $region25
    $region24: #{bert_pretrain_forward.29} parent=1 // pred_region
      %s179 = ssub.s32 256, 256
      %180 = vsyncadd [#allocation4], %s179
      %s181 = sshll.u32 [#allocation3], 4
      %s182 = int_to_ptr.vmem [resolvable:$true] %s181
      %187 = dma.vmem_to_hbm [thread:$0]  %s182, 256, %s3, [#allocation4], 128, 128, 8
    $region25: #{bert_pretrain_forward.29} parent=1 // pred_fallthru
      _
    // Predicated region
    $region26: #{bert_pretrain_forward.29} parent=1 // pred_check
      _
    $region27: #{bert_pretrain_forward.29} parent=1 // pred_check_branch
      %189 = sbr.rel (0) target = $region29
    $region28: #{bert_pretrain_forward.29} parent=1 // pred_region
      %190 = dma.done [#allocation4], 256
    $region29: #{bert_pretrain_forward.29} parent=1 // pred_fallthru
      _
    %191 = vsyncpa [#allocation4], 1

// kernel: bert_pretrain_forward.20
$region0: #{bert_pretrain_forward.20}
  #allocation0 [shape = 'u32[]', space=smem, size = 0x4, offset = 0x4, fixed_abs, tag = 'smem constant byte address 0x4 - core index']
  #allocation1 [shape = 'u32[144,128]{1,0:T(1,128)}', space=vmem, size = 0x12000, scoped, tag = 'internal scratch']
  #allocation2 [shape = 'f32[16,32]{1,0:T(8,128)}', space=vmem, size = 0x2000, scoped, tag = 'scratch operand']
  %s0 = inlined_call_operand.vmem [shape: bf16[16,64], index: 0, kind: input, shape index: {}]
  %s1 = inlined_call_operand.vmem [shape: bf16[64,32], index: 1, kind: input, shape index: {}]
  %s2 = inlined_call_operand.vmem [shape: f32[1,32], index: 2, kind: input, shape index: {}]
  %s3 = inlined_call_operand.vmem [shape: bf16[16,32], index: 3, kind: output, shape index: {}]
  %s4 = sld [smem:[#allocation0]]
  $region30: #{bert_pretrain_forward.20} parent=0
    _
  %s6 = ssub.s32 1, %s4
  %s7 = scalar_select 0, %s6, %s4
  // Predicated region
  $region2: #{bert_pretrain_forward.20} parent=0 // pred_check
    _
  $region3: #{bert_pretrain_forward.20} parent=0 // pred_check_branch
    %9 = sbr.rel (0) target = $region5
  $region4: #{bert_pretrain_forward.20} parent=0 // pred_region
    _
  $region5: #{bert_pretrain_forward.20} parent=0 // pred_fallthru
    _
  // Predicated region
  $region6: #{bert_pretrain_forward.20} parent=0 // pred_check
    _
  $region7: #{bert_pretrain_forward.20} parent=0 // pred_check_branch
    %11 = sbr.rel (0) target = $region9
  $region8: #{bert_pretrain_forward.20} parent=0 // pred_region
    _
  $region9: #{bert_pretrain_forward.20} parent=0 // pred_fallthru
    _
  // Predicated region
  $region10: #{bert_pretrain_forward.20} parent=0 // pred_check
    _
  $region11: #{bert_pretrain_forward.20} parent=0 // pred_check_branch
    %13 = sbr.rel (0) target = $region13
  $region12: #{bert_pretrain_forward.20} parent=0 // pred_region
    _
  $region13: #{bert_pretrain_forward.20} parent=0 // pred_fallthru
    _
  %p15 = scmp.eq.s32.totalorder 0, 0
  // Predicated region
  $region14: #{bert_pretrain_forward.20} parent=0 // pred_check
    %p16 = pneg %p15
  $region15: #{bert_pretrain_forward.20} parent=0 // pred_check_branch
    %18 = sbr.rel (%p16) target = $region17
  $region16: #{bert_pretrain_forward.20} parent=0 // pred_region
    %vm19 = vcmask 261120
    %20 = vst.msk [vmem:[#allocation2] sm:$0xff] %vm19, 0.0
    %21 = vst.msk [vmem:[#allocation2 + $0x8] sm:$0xff] %vm19, 0.0
  $region17: #{bert_pretrain_forward.20} parent=0 // pred_fallthru
    _
  %v22 = vld [vmem:[#allocation2] sm:$0xff]
  %v23 = vld [vmem:[#allocation2 + $0x8] sm:$0xff]
  %v24 = vld [vmem:[%s0] sm:$0xf]
  %v25 = vld [vmem:[%s0 + $0x4] sm:$0xf]
  %v26 = vld [vmem:[%s1] sm:$0xf]
  %v27 = vld [vmem:[%s1 + $0x4] sm:$0xf]
  %v28 = vld [vmem:[%s1 + $0x8] sm:$0xf]
  %v29 = vld [vmem:[%s1 + $0xc] sm:$0xf]
  %v30 = vld [vmem:[%s1 + $0x10] sm:$0xf]
  %v31 = vld [vmem:[%s1 + $0x14] sm:$0xf]
  %v32 = vld [vmem:[%s1 + $0x18] sm:$0xf]
  %v33 = vld [vmem:[%s1 + $0x1c] sm:$0xf]
  %v36 = vunpack.c.l.b16 %v24
  %v37 = vunpack.c.l.b16 %v25
  %v38 = vpack.c.b16 %v37, %v36
  %v47 = vunpack.c.l.b16 %v26
  %v48 = vunpack.c.l.b16 %v27
  %v49 = vunpack.c.l.b16 %v28
  %v50 = vunpack.c.l.b16 %v29
  %v51 = vunpack.c.l.b16 %v30
  %v52 = vunpack.c.l.b16 %v31
  %v53 = vunpack.c.l.b16 %v32
  %v54 = vunpack.c.l.b16 %v33
  %v55 = vpack.c.b16 %v48, %v47
  %v56 = vpack.c.b16 %v50, %v49
  %v57 = vpack.c.b16 %v52, %v51
  %v58 = vpack.c.b16 %v54, %v53
  %vm63 = vcmask 523264
  %v65 = vsel %vm63, %v38, 0
  %67 = vmatprep.subr.bf16.mxu0 0
  %68 = vmatpush1.bf16.msra.mxu0 %v55
  %69 = vmatprep.subr.bf16.mxu0 0
  %70 = vmatpush1.bf16.msra.mxu0 %v56
  %71 = vmatprep.subr.bf16.mxu0 0
  %72 = vmatpush1.bf16.msra.mxu0 %v57
  %73 = vmatprep.subr.bf16.mxu0 0
  %74 = vmatpush1.bf16.msra.mxu0 %v58
  %75 = vmatprep.subr.bf16.mxu0 0
  %76 = vmatpush1.bf16.msra.mxu0 0
  %77 = vmatprep.subr.bf16.mxu0 0
  %78 = vmatpush1.bf16.msra.mxu0 0
  %79 = vmatprep.subr.bf16.mxu0 0
  %80 = vmatpush1.bf16.msra.mxu0 0
  %81 = vmatprep.subr.bf16.mxu0 0
  %82 = vmatpush1.bf16.msra.mxu0 0
  %83 = vmatprep.subr.bf16.mxu0 0
  %84 = vmatpush1.bf16.msra.mxu0 0
  %85 = vmatprep.subr.bf16.mxu0 0
  %86 = vmatpush1.bf16.msra.mxu0 0
  %87 = vmatprep.subr.bf16.mxu0 0
  %88 = vmatpush1.bf16.msra.mxu0 0
  %89 = vmatprep.subr.bf16.mxu0 0
  %90 = vmatpush1.bf16.msra.mxu0 0
  %91 = vmatprep.subr.bf16.mxu0 0
  %92 = vmatpush1.bf16.msra.mxu0 0
  %93 = vmatprep.subr.bf16.mxu0 0
  %94 = vmatpush1.bf16.msra.mxu0 0
  %95 = vmatprep.subr.bf16.mxu0 0
  %96 = vmatpush1.bf16.msra.mxu0 0
  %97 = vmatprep.subr.bf16.mxu0 0
  %98 = vmatpush1.bf16.msra.mxu0 0
  %99 = vmatprep.mubr.bf16.mxu0 0
  %100 = vmatmul.mubr.bf16.gmra.mrb[0].mxu0 %v65
  %v101 = vpop.f32.mrb[0].mxu0
  %v102 = vadd.f32 0.0, %v101
  %v103 = vpop.f32.mrb[0].mxu0
  %v104 = vpop.f32.mrb[0].mxu0
  %v105 = vadd.f32 0.0, %v104
  %v106 = vpop.f32.mrb[0].mxu0
  %107 = vdwg.mxu0
  %v108 = vadd.f32 %v22, %v102
  %v109 = vadd.f32 %v23, %v105
  %vm110 = vcmask 261120
  %111 = vst.msk [vmem:[#allocation2] sm:$0xff] %vm110, %v108
  %112 = vst.msk [vmem:[#allocation2 + $0x8] sm:$0xff] %vm110, %v109
  // Predicated region
  $region18: #{bert_pretrain_forward.20} parent=0 // pred_check
    %p113 = pneg %p15
  $region19: #{bert_pretrain_forward.20} parent=0 // pred_check_branch
    %115 = sbr.rel (%p113) target = $region21
  $region20: #{bert_pretrain_forward.20} parent=0 // pred_region
    %v116 = vld [vmem:[#allocation2] sm:$0xff]
    %v117 = vld [vmem:[#allocation2 + $0x8] sm:$0xff]
    %v118 = vld [vmem:[%s2] sm:$0x1]
    %v120 = vlaneseq
    %v121 = vshrl.u32 %v120, 7
    %v122 = vsub.s32 0, %v121
    %v123 = vrot.slane %v118, %v122
    %v125 = vadd.f32 %v116, %v123
    %v126 = vadd.f32 %v117, %v123
    %v127 = vpack.c.bf16 %v126, %v125
    %v129 = vunpack.c.l.b16 %v127
    %v130 = vunpack.c.h.b16 %v127
    %v131 = vpack.c.b16 %v129, %v129
    %v132 = vpack.c.b16 %v130, %v130
    %vm135 = vcmask 257024
    %136 = vst.msk [vmem:[%s3] sm:$0xf] %vm135, %v131
    %137 = vst.msk [vmem:[%s3 + $0x4] sm:$0xf] %vm135, %v132
  $region21: #{bert_pretrain_forward.20} parent=0 // pred_fallthru
    _
  // Predicated region
  $region22: #{bert_pretrain_forward.20} parent=0 // pred_check
    _
  $region23: #{bert_pretrain_forward.20} parent=0 // pred_check_branch
    %139 = sbr.rel (0) target = $region25
  $region24: #{bert_pretrain_forward.20} parent=0 // pred_region
    _
  $region25: #{bert_pretrain_forward.20} parent=0 // pred_fallthru
    _
  // Predicated region
  $region26: #{bert_pretrain_forward.20} parent=0 // pred_check
    _
  $region27: #{bert_pretrain_forward.20} parent=0 // pred_check_branch
    %141 = sbr.rel (0) target = $region29
  $region28: #{bert_pretrain_forward.20} parent=0 // pred_region
    _
  $region29: #{bert_pretrain_forward.20} parent=0 // pred_fallthru
    _

// kernel: bert_pretrain_forward.19
$region0: #{bert_pretrain_forward.19}
  #allocation0 [shape = 'u32[]', space=smem, size = 0x4, offset = 0x4, fixed_abs, tag = 'smem constant byte address 0x4 - core index']
  #allocation1 [shape = 'u32[144,128]{1,0:T(1,128)}', space=vmem, size = 0x12000, scoped, tag = 'internal scratch']
  #allocation2 [shape = 'f32[16,64]{1,0:T(8,128)}', space=vmem, size = 0x2000, scoped, tag = 'scratch operand']
  %s0 = inlined_call_operand.vmem [shape: bf16[16,32], index: 0, kind: input, shape index: {}]
  %s1 = inlined_call_operand.vmem [shape: bf16[32,64], index: 1, kind: input, shape index: {}]
  %s2 = inlined_call_operand.vmem [shape: f32[1,64], index: 2, kind: input, shape index: {}]
  %s3 = inlined_call_operand.vmem [shape: bf16[16,64], index: 3, kind: output, shape index: {}]
  %s4 = sld [smem:[#allocation0]]
  $region30: #{bert_pretrain_forward.19} parent=0
    _
  %s6 = ssub.s32 1, %s4
  %s7 = scalar_select 0, %s6, %s4
  // Predicated region
  $region2: #{bert_pretrain_forward.19} parent=0 // pred_check
    _
  $region3: #{bert_pretrain_forward.19} parent=0 // pred_check_branch
    %9 = sbr.rel (0) target = $region5
  $region4: #{bert_pretrain_forward.19} parent=0 // pred_region
    _
  $region5: #{bert_pretrain_forward.19} parent=0 // pred_fallthru
    _
  // Predicated region
  $region6: #{bert_pretrain_forward.19} parent=0 // pred_check
    _
  $region7: #{bert_pretrain_forward.19} parent=0 // pred_check_branch
    %11 = sbr.rel (0) target = $region9
  $region8: #{bert_pretrain_forward.19} parent=0 // pred_region
    _
  $region9: #{bert_pretrain_forward.19} parent=0 // pred_fallthru
    _
  // Predicated region
  $region10: #{bert_pretrain_forward.19} parent=0 // pred_check
    _
  $region11: #{bert_pretrain_forward.19} parent=0 // pred_check_branch
    %13 = sbr.rel (0) target = $region13
  $region12: #{bert_pretrain_forward.19} parent=0 // pred_region
    _
  $region13: #{bert_pretrain_forward.19} parent=0 // pred_fallthru
    _
  %p15 = scmp.eq.s32.totalorder 0, 0
  // Predicated region
  $region14: #{bert_pretrain_forward.19} parent=0 // pred_check
    %p16 = pneg %p15
  $region15: #{bert_pretrain_forward.19} parent=0 // pred_check_branch
    %18 = sbr.rel (%p16) target = $region17
  $region16: #{bert_pretrain_forward.19} parent=0 // pred_region
    %vm19 = vcmask 523264
    %20 = vst.msk [vmem:[#allocation2] sm:$0xff] %vm19, 0.0
    %21 = vst.msk [vmem:[#allocation2 + $0x8] sm:$0xff] %vm19, 0.0
  $region17: #{bert_pretrain_forward.19} parent=0 // pred_fallthru
    _
  %v22 = vld [vmem:[#allocation2] sm:$0xff]
  %v23 = vld [vmem:[#allocation2 + $0x8] sm:$0xff]
  %v24 = vld [vmem:[%s0] sm:$0xf]
  %v25 = vld [vmem:[%s0 + $0x4] sm:$0xf]
  %v26 = vld [vmem:[%s1] sm:$0xf]
  %v27 = vld [vmem:[%s1 + $0x4] sm:$0xf]
  %v28 = vld [vmem:[%s1 + $0x8] sm:$0xf]
  %v29 = vld [vmem:[%s1 + $0xc] sm:$0xf]
  %v32 = vunpack.c.l.b16 %v24
  %v33 = vunpack.c.l.b16 %v25
  %v34 = vpack.c.b16 %v33, %v32
  %v39 = vunpack.c.l.b16 %v26
  %v40 = vunpack.c.l.b16 %v27
  %v41 = vunpack.c.l.b16 %v28
  %v42 = vunpack.c.l.b16 %v29
  %v43 = vpack.c.b16 %v40, %v39
  %v44 = vpack.c.b16 %v42, %v41
  %vm47 = vcmask 261120
  %v49 = vsel %vm47, %v34, 0
  %51 = vmatprep.subr.bf16.mxu0 0
  %52 = vmatpush1.bf16.msra.mxu0 %v43
  %53 = vmatprep.subr.bf16.mxu0 0
  %54 = vmatpush1.bf16.msra.mxu0 %v44
  %55 = vmatprep.subr.bf16.mxu0 0
  %56 = vmatpush1.bf16.msra.mxu0 0
  %57 = vmatprep.subr.bf16.mxu0 0
  %58 = vmatpush1.bf16.msra.mxu0 0
  %59 = vmatprep.subr.bf16.mxu0 0
  %60 = vmatpush1.bf16.msra.mxu0 0
  %61 = vmatprep.subr.bf16.mxu0 0
  %62 = vmatpush1.bf16.msra.mxu0 0
  %63 = vmatprep.subr.bf16.mxu0 0
  %64 = vmatpush1.bf16.msra.mxu0 0
  %65 = vmatprep.subr.bf16.mxu0 0
  %66 = vmatpush1.bf16.msra.mxu0 0
  %67 = vmatprep.subr.bf16.mxu0 0
  %68 = vmatpush1.bf16.msra.mxu0 0
  %69 = vmatprep.subr.bf16.mxu0 0
  %70 = vmatpush1.bf16.msra.mxu0 0
  %71 = vmatprep.subr.bf16.mxu0 0
  %72 = vmatpush1.bf16.msra.mxu0 0
  %73 = vmatprep.subr.bf16.mxu0 0
  %74 = vmatpush1.bf16.msra.mxu0 0
  %75 = vmatprep.subr.bf16.mxu0 0
  %76 = vmatpush1.bf16.msra.mxu0 0
  %77 = vmatprep.subr.bf16.mxu0 0
  %78 = vmatpush1.bf16.msra.mxu0 0
  %79 = vmatprep.subr.bf16.mxu0 0
  %80 = vmatpush1.bf16.msra.mxu0 0
  %81 = vmatprep.subr.bf16.mxu0 0
  %82 = vmatpush1.bf16.msra.mxu0 0
  %83 = vmatprep.mubr.bf16.mxu0 0
  %84 = vmatmul.mubr.bf16.gmra.mrb[0].mxu0 %v49
  %v85 = vpop.f32.mrb[0].mxu0
  %v86 = vadd.f32 0.0, %v85
  %v87 = vpop.f32.mrb[0].mxu0
  %v88 = vpop.f32.mrb[0].mxu0
  %v89 = vadd.f32 0.0, %v88
  %v90 = vpop.f32.mrb[0].mxu0
  %91 = vdwg.mxu0
  %v92 = vadd.f32 %v22, %v86
  %v93 = vadd.f32 %v23, %v89
  %vm94 = vcmask 523264
  %95 = vst.msk [vmem:[#allocation2] sm:$0xff] %vm94, %v92
  %96 = vst.msk [vmem:[#allocation2 + $0x8] sm:$0xff] %vm94, %v93
  // Predicated region
  $region18: #{bert_pretrain_forward.19} parent=0 // pred_check
    %p97 = pneg %p15
  $region19: #{bert_pretrain_forward.19} parent=0 // pred_check_branch
    %99 = sbr.rel (%p97) target = $region21
  $region20: #{bert_pretrain_forward.19} parent=0 // pred_region
    %v100 = vld [vmem:[#allocation2] sm:$0xff]
    %v101 = vld [vmem:[#allocation2 + $0x8] sm:$0xff]
    %v102 = vld [vmem:[%s2] sm:$0x1]
    %v104 = vlaneseq
    %v105 = vshrl.u32 %v104, 7
    %v106 = vsub.s32 0, %v105
    %v107 = vrot.slane %v102, %v106
    %v109 = vadd.f32 %v100, %v107
    %v110 = vadd.f32 %v101, %v107
    %v111 = vmul.f32 %v109, 0.5
    %v112 = vmul.f32 %v110, 0.5
    %v113 = vmul.f32 %v109, 0.044715
    %v114 = vmul.f32 %v110, 0.044715
    %v115 = vmul.f32 %v113, %v109
    %v116 = vmul.f32 %v114, %v110
    %v117 = vmul.f32 %v115, %v109
    %v118 = vmul.f32 %v116, %v110
    %v119 = vadd.f32 %v109, %v117
    %v120 = vadd.f32 %v110, %v118
    %v121 = vmul.f32 %v119, 0.7978846
    %v122 = vmul.f32 %v120, 0.7978846
    %v123 = vtanh.pop %v121
    %v124 = vtanh.pop %v122
    %v125 = vadd.f32 %v123, 1.0
    %v126 = vadd.f32 %v124, 1.0
    %v127 = vmul.f32 %v111, %v125
    %v128 = vmul.f32 %v112, %v126
    %v129 = vpack.c.bf16 %v128, %v127
    %v131 = vunpack.c.l.b16 %v129
    %v132 = vunpack.c.h.b16 %v129
    %v133 = vpack.c.b16 %v131, %v131
    %v134 = vpack.c.b16 %v132, %v132
    %vm137 = vcmask 519168
    %138 = vst.msk [vmem:[%s3] sm:$0xf] %vm137, %v133
    %139 = vst.msk [vmem:[%s3 + $0x4] sm:$0xf] %vm137, %v134
  $region21: #{bert_pretrain_forward.19} parent=0 // pred_fallthru
    _
  // Predicated region
  $region22: #{bert_pretrain_forward.19} parent=0 // pred_check
    _
  $region23: #{bert_pretrain_forward.19} parent=0 // pred_check_branch
    %141 = sbr.rel (0) target = $region25
  $region24: #{bert_pretrain_forward.19} parent=0 // pred_region
    _
  $region25: #{bert_pretrain_forward.19} parent=0 // pred_fallthru
    _
  // Predicated region
  $region26: #{bert_pretrain_forward.19} parent=0 // pred_check
    _
  $region27: #{bert_pretrain_forward.19} parent=0 // pred_check_branch
    %143 = sbr.rel (0) target = $region29
  $region28: #{bert_pretrain_forward.19} parent=0 // pred_region
    _
  $region29: #{bert_pretrain_forward.19} parent=0 // pred_fallthru
    _

</llo_original>
